<compile_context>
chip_gen: v7x
topology: tpu7x:2x2x1
jax: 0.10.0
libtpu: 0.0.40
codegen_flags: <defaults>
</compile_context>

<pallas_src>
from functools import partial

import jax
import jax.numpy as jnp
import numpy as np
from jax.experimental import pallas as pl
from jax.experimental.pallas import tpu as pltpu


# MXU operand dtype.  Set to jnp.float32 for exact f32 matmuls if desired.
MATMUL_DTYPE = jnp.bfloat16


# ----------------------------------------------------------------------------
# Synthetic module config (stands in for parse_model_config(..., 'TaskBranch'))
# ----------------------------------------------------------------------------
MODULE_DEFS = [
    {'type': 'net', 'input_channels': '4'},
    {'type': 'convolutional', 'batch_normalize': '1', 'filters': '8',
     'size': '3', 'stride': '1', 'pad': '1', 'activation': 'leaky'},
    {'type': 'convolutional', 'batch_normalize': '1', 'filters': '16',
     'size': '3', 'stride': '1', 'pad': '1', 'activation': 'leaky'},
    {'type': 'convolutional', 'batch_normalize': '1', 'filters': '8',
     'size': '1', 'stride': '1', 'pad': '0', 'activation': 'leaky'},
    {'type': 'convolutional', 'batch_normalize': '1', 'filters': '16',
     'size': '3', 'stride': '1', 'pad': '1', 'activation': 'leaky'},
    {'type': 'shortcut', 'from': '-3', 'activation': 'linear'},
    {'type': 'convolutional', 'batch_normalize': '0', 'filters': '24',
     'size': '1', 'stride': '1', 'pad': '0', 'activation': 'linear'},
    {'type': 'yolo', 'mask': '0,1,2',
     'anchors': '10,14, 23,27, 37,58, 81,82, 135,169, 344,319',
     'classes': '3'},
]


# ----------------------------------------------------------------------------
# Small helpers
# ----------------------------------------------------------------------------
def _leaky(z):
    return jnp.maximum(z, 0.1 * z)          # LeakyReLU(0.1) as a single VALU max


def _sigmoid(z):
    return 1.0 / (1.0 + jnp.exp(-z))


def _div_mod_static(x, d, n_max):
    """x // d and x % d for non-negative int32 vectors, static divisor d.

    Uses shift/mask for power-of-two d; otherwise a comparison ladder (bounded
    by n_max quotient values) so no vector integer divide is ever emitted.
    """
    if d & (d - 1) == 0:
        k = d.bit_length() - 1
        return x >> k, x & (d - 1)
    q = jnp.zeros_like(x)
    for t in range(1, n_max):
        q = q + (x >= t * d).astype(x.dtype)
    return q, x - q * d


# ----------------------------------------------------------------------------
# Fused Pallas kernel (whole batch, whole network, single grid step)
# ----------------------------------------------------------------------------
def _fused_yolo_kernel(x_ref, w1_ref, b1_ref, w2_ref, b2_ref, w3_ref, b3_ref,
                       w4_ref, b4_ref, wht_ref, bht_ref, out_ref, *,
                       H, W, N, num_anchors, num_classes,
                       stride_h, stride_w, anchors, mm_dtype):
    HW = H * W
    M = N * HW                    # lane axis: samples stacked contiguously
    box = 5 + num_classes
    R = num_anchors * box
    f32 = jnp.float32

    # ---- per-lane spatial metadata (integer iota; shift/mask, no float div) --
    q = jax.lax.broadcasted_iota(jnp.int32, (1, M), 1)
    _, p = _div_mod_static(q, HW, N)          # position within its sample
    row, col = _div_mod_static(p, W, H)       # (i, j) grid cell
    top_ok = row >= 1
    bot_ok = row <= H - 2
    left_ok = col >= 1
    right_ok = col <= W - 2

    def tap_mask(di, dj):
        m = None
        if di == -1:
            m = top_ok
        elif di == 1:
            m = bot_ok
        if dj == -1:
            m = left_ok if m is None else m & left_ok
        elif dj == 1:
            m = right_ok if m is None else m & right_ok
        return m

    def conv3x3(act, w_ref, b_ref):
        # act: (Cin, M) f32.  w_ref: (Cout, 9*Cin) bf16.  b_ref: (Cout, 1) f32.
        # 9 taps = lane rolls of the channel-major activation + zero-pad masks
        # (roll uses the otherwise-idle XLU slot; no VMEM scratch round trip).
        taps = []
        for di in (-1, 0, 1):
            for dj in (-1, 0, 1):
                s = di * W + dj
                t = act if s == 0 else pltpu.roll(act, shift=(-s) % M, axis=1)
                m = tap_mask(di, dj)
                if m is not None:
                    t = jnp.where(m, t, jnp.zeros_like(t))
                taps.append(t)
        # One matmul with K = 9*Cin (single MXU pass, no accumulate adds).
        stacked = jnp.concatenate(taps, axis=0).astype(mm_dtype)   # (9*Cin, M)
        out = jax.lax.dot_general(
            w_ref[...], stacked,
            dimension_numbers=(((1,), (0,)), ((), ())),
            preferred_element_type=jnp.float32)                    # (Cout, M)
        return out + b_ref[...]

    def conv1x1(act, w_ref, b_ref):
        return jax.lax.dot_general(
            w_ref[...], act.astype(mm_dtype),
            dimension_numbers=(((1,), (0,)), ((), ())),
            preferred_element_type=jnp.float32) + b_ref[...]

    # ---- backbone: everything stays in vregs, channel-major (C, N*H*W) ------
    x0 = x_ref[...]                                         # (Cin, M) f32
    a1 = _leaky(conv3x3(x0, w1_ref, b1_ref))                # (8,  M)
    a2 = _leaky(conv3x3(a1, w2_ref, b2_ref))                # (16, M)
    a3 = _leaky(conv1x1(a2, w3_ref, b3_ref))                # (8,  M)
    a4 = _leaky(conv3x3(a3, w4_ref, b4_ref))                # (16, M)
    feat = a4 + a2                                          # shortcut(from=-3)
    head = conv1x1(feat, wht_ref, bht_ref)                  # (R, M) linear

    # ---- YOLOLayer decode (eval path), vectorized over the full (R, M) head --
    r_idx = jax.lax.broadcasted_iota(jnp.int32, (R, 1), 0)
    is_cx = None
    is_cy = None
    is_h = None
    is_w = None
    anchor_mul = jnp.zeros((R, 1), f32)
    for a, (a_w, a_h) in enumerate(anchors):
        base = a * box
        m_cx = r_idx == base + 0
        m_cy = r_idx == base + 1
        m_h = r_idx == base + 2
        m_w = r_idx == base + 3
        is_cx = m_cx if is_cx is None else (is_cx | m_cx)
        is_cy = m_cy if is_cy is None else (is_cy | m_cy)
        is_h = m_h if is_h is None else (is_h | m_h)
        is_w = m_w if is_w is None else (is_w | m_w)
        anchor_mul = jnp.where(m_h, float(a_h), anchor_mul)
        anchor_mul = jnp.where(m_w, float(a_w), anchor_mul)
    is_center = is_cx | is_cy
    is_size = is_h | is_w

    sig = _sigmoid(head)                                    # dense (R, M)
    size_full = jnp.exp(head) * anchor_mul                  # rows 2,3: bh, bw
    # Bring each anchor's (bh, bw) rows up to its (cx, cy) rows (shift by 2).
    size_shift = jnp.concatenate([size_full[2:, :], size_full[:2, :]], axis=0)

    gx = row.astype(f32)                                    # PyTorch grid_x (i)
    gy = col.astype(f32)                                    # PyTorch grid_y (j)
    grid_rm = jnp.where(is_cx, gx, jnp.where(is_cy, gy, 0.0))      # (R, M)
    stride_rm = jnp.where(is_cx, stride_h, stride_w)               # (R, 1)
    center = (sig + grid_rm) * stride_rm - 0.5 * size_shift

    out_ref[...] = jnp.where(is_center, center,
                             jnp.where(is_size, size_full, sig))


# ----------------------------------------------------------------------------
# pallas_call wrapper (forward pass, targets=None)
# ----------------------------------------------------------------------------
def _const_spec(arr):
    zeros = (0,) * arr.ndim
    return pl.BlockSpec(arr.shape, lambda i, _z=zeros: _z)


def yolo_task_forward(x_nchw, module_defs, params, hyper, img_height, img_width):
    """Eval-mode YoloTask forward; returns (None, yolo_outputs, None)."""
    # TODO(synk): the training branch (targets != None -> build_targets +
    # MSE/BCE losses + metrics) is not implemented; this is the inference path.
    layer_types = tuple(d['type'] for d in module_defs)
    assert layer_types == ('convolutional',) * 4 + ('shortcut', 'convolutional',
                                                    'yolo'), \
        'fused kernel is specialized to the synthetic TaskBranch config'

    n, cin, hh, ww = x_nchw.shape
    anchors = tuple(tuple(a) for a in hyper['anchors'])
    num_anchors = len(anchors)
    num_classes = hyper['num_classes']
    box = 5 + num_classes
    R = num_anchors * box
    HW = hh * ww
    M = n * HW

    # Channel-major, lane-dense input: (Cin, N*H*W); both samples stacked along
    # the 512-lane axis so the whole batch is one grid step / one DMA.
    x_cm = jnp.transpose(x_nchw, (1, 0, 2, 3)).reshape(cin, M)

    mmd = MATMUL_DTYPE
    w1 = params[0]['w'].astype(mmd); b1 = params[0]['b'].reshape(-1, 1)
    w2 = params[1]['w'].astype(mmd); b2 = params[1]['b'].reshape(-1, 1)
    w3 = params[2]['w'].astype(mmd); b3 = params[2]['b'].reshape(-1, 1)
    w4 = params[3]['w'].astype(mmd); b4 = params[3]['b'].reshape(-1, 1)
    wht = params[5]['w'].astype(mmd); bht = params[5]['b'].reshape(-1, 1)
    assert wht.shape[0] == R

    kernel = partial(
        _fused_yolo_kernel, H=hh, W=ww, N=n, num_anchors=num_anchors,
        num_classes=num_classes, stride_h=float(img_height) / hh,
        stride_w=float(img_width) / ww, anchors=anchors, mm_dtype=mmd)

    args = (x_cm, w1, b1, w2, b2, w3, b3, w4, b4, wht, bht)
    out_cm = pl.pallas_call(
        kernel,
        out_shape=jax.ShapeDtypeStruct((R, M), jnp.float32),
        grid_spec=pltpu.PrefetchScalarGridSpec(
            num_scalar_prefetch=0,
            grid=(1,),                                 # whole batch, one step
            in_specs=[_const_spec(a) for a in args],
            out_specs=pl.BlockSpec((R, M), lambda i: (0, 0)),
        ),
        compiler_params=pltpu.CompilerParams(
            dimension_semantics=("arbitrary",)),
    )(*args)

    # Kernel output is channel-major (A*box, N*HW), lane dense.  Present the
    # PyTorch (N, A*H*W, 5+C) layout.  Layout plumbing only, no compute.
    yolo_outputs = jnp.transpose(out_cm.reshape(num_anchors, box, n, HW),
                                 (2, 0, 3, 1)).reshape(n, num_anchors * HW, box)
    return None, yolo_outputs, None


# ----------------------------------------------------------------------------
# Parameter init (mirrors create_modules: conv + eval-mode BN fold + yolo hyper)
# ----------------------------------------------------------------------------
def parse_and_init(key, module_defs):
    defs = [dict(d) for d in module_defs]
    net = defs.pop(0)
    output_filters = [int(net['input_channels'])]
    params = []
    hyper = {'anchors': [], 'num_classes': 0}
    for mdef in defs:
        if mdef['type'] == 'convolutional':
            bn = int(mdef['batch_normalize'])
            cin = output_filters[-1]
            cout = int(mdef['filters'])
            ksz = int(mdef['size'])
            key, k_w, k_b, k_g, k_be, k_m, k_v = jax.random.split(key, 7)
            w = 0.1 * jax.random.normal(k_w, (cout, cin, ksz, ksz), jnp.float32)
            if bn:      # eval-mode BatchNorm folded into the conv
                gamma = 0.5 + jax.random.uniform(k_g, (cout,), jnp.float32)
                beta = 0.1 * jax.random.normal(k_be, (cout,), jnp.float32)
                r_mean = 0.1 * jax.random.normal(k_m, (cout,), jnp.float32)
                r_var = 0.5 + jax.random.uniform(k_v, (cout,), jnp.float32)
                scale = gamma * jax.lax.rsqrt(r_var + 1e-5)
                w = w * scale[:, None, None, None]
                b = beta - r_mean * scale
            else:
                b = 0.1 * jax.random.normal(k_b, (cout,), jnp.float32)
            # Channel-major kernel form: (Cout, K) with K = ksz*ksz*Cin and
            # column index = (ki*ksz + kj) * Cin + c.
            w_k = jnp.transpose(w, (0, 2, 3, 1)).reshape(cout, ksz * ksz * cin)
            params.append({'w': w_k, 'b': b})
            output_filters.append(cout)
        elif mdef['type'] == 'shortcut':
            params.append(None)
            output_filters.append(output_filters[1:][int(mdef['from'])])
        elif mdef['type'] == 'yolo':
            mask = [int(v) for v in mdef['mask'].split(',')]
            flat = [int(v) for v in mdef['anchors'].split(',')]
            pairs = [(flat[i], flat[i + 1]) for i in range(0, len(flat), 2)]
            hyper['anchors'] = [pairs[i] for i in mask]
            hyper['num_classes'] = int(mdef['classes'])
            params.append(None)
            output_filters.append(output_filters[-1])
        else:   # route / maxpool / upsample: not present in this synthetic cfg
            params.append(None)
            output_filters.append(output_filters[-1])
    return defs, params, hyper


# ----------------------------------------------------------------------------
# Pure-JAX (XLA) reference, mirroring the kernel's numerics
# ----------------------------------------------------------------------------
def reference_forward(x_nchw, params, hyper, img_height, img_width,
                      mm_dtype=MATMUL_DTYPE):
    def conv(x_nhwc, w_cm, b, ksz):
        n, h, wd, c = x_nhwc.shape
        if ksz == 3:
            xp = jnp.pad(x_nhwc, ((0, 0), (1, 1), (1, 1), (0, 0)))
            cols = [xp[:, i:i + h, j:j + wd, :]
                    for i in range(3) for j in range(3)]
            patches = jnp.concatenate(cols, axis=-1).reshape(n * h * wd, 9 * c)
        else:
            patches = x_nhwc.reshape(n * h * wd, c)
        y = jnp.dot(patches.astype(mm_dtype),
                    jnp.transpose(w_cm).astype(mm_dtype),
                    preferred_element_type=jnp.float32) + b[None, :]
        return y.reshape(n, h, wd, -1)

    leaky = lambda z: jnp.maximum(z, 0.1 * z)
    x = jnp.transpose(x_nchw, (0, 2, 3, 1))
    a1 = leaky(conv(x, params[0]['w'], params[0]['b'], 3))
    a2 = leaky(conv(a1, params[1]['w'], params[1]['b'], 3))
    a3 = leaky(conv(a2, params[2]['w'], params[2]['b'], 1))
    a4 = leaky(conv(a3, params[3]['w'], params[3]['b'], 3))
    feat = a4 + a2
    head = conv(feat, params[5]['w'], params[5]['b'], 1)           # linear

    n, h, w, _ = head.shape
    anchors = jnp.asarray(hyper['anchors'], jnp.float32)           # (A,2)=(w,h)
    num_anchors = int(anchors.shape[0])
    num_classes = hyper['num_classes']
    box = 5 + num_classes
    stride_h = img_height / h
    stride_w = img_width / w
    pred = head.reshape(n, h, w, num_anchors, box).transpose(0, 3, 1, 2, 4)
    sx = jax.nn.sigmoid(pred[..., 0]); sy = jax.nn.sigmoid(pred[..., 1])
    th = pred[..., 2]; tw = pred[..., 3]
    conf = jax.nn.sigmoid(pred[..., 4]); cls = jax.nn.sigmoid(pred[..., 5:])
    grid_x = jnp.arange(h, dtype=jnp.float32)[None, None, :, None]
    grid_y = jnp.arange(w, dtype=jnp.float32)[None, None, None, :]
    a_w = anchors[:, 0][None, :, None, None]
    a_h = anchors[:, 1][None, :, None, None]
    bh = jnp.exp(th) * a_h
    bw = jnp.exp(tw) * a_w
    bx = (sx + grid_x) * stride_h - bh / 2
    by = (sy + grid_y) * stride_w - bw / 2
    boxes = jnp.stack([bx, by, bh, bw], axis=-1)
    return jnp.concatenate([boxes.reshape(n, -1, 4),
                            conf.reshape(n, -1, 1),
                            cls.reshape(n, -1, num_classes)], axis=-1)


if __name__ == "__main__":
    key = jax.random.PRNGKey(0)
    k_x, k_p = jax.random.split(key)

    module_defs, params, hyper = parse_and_init(k_p, MODULE_DEFS)

    IMG_H = IMG_W = 16
    # PyTorch NCHW convention: batch=2, channels=4, spatial 16x16.
    x = jax.random.normal(k_x, (2, 4, IMG_H, IMG_W), jnp.float32)

    fwd = jax.jit(lambda xx: yolo_task_forward(xx, module_defs, params, hyper,
                                               IMG_H, IMG_W))
    loss, yolo_out, metrics = fwd(x)
    jax.block_until_ready(yolo_out)

    num_anchors = len(hyper['anchors'])
    box = 5 + hyper['num_classes']
    assert yolo_out.shape == (2, num_anchors * IMG_H * IMG_W, box), yolo_out.shape
    assert loss is None and metrics is None

    ref = jax.jit(lambda xx: reference_forward(xx, params, hyper,
                                               IMG_H, IMG_W))(x)
    np.testing.assert_allclose(np.asarray(yolo_out), np.asarray(ref),
                               rtol=2e-2, atol=2e-2)
    print("KERNEL_OK")
</pallas_src>

<mosaic_0001>
module attributes {stable_mosaic.version = 11 : i64} {
  func.func @_fused_yolo_kernel(%arg0: i32, %arg1: memref<4x512xf32, #tpu.memory_space<vmem>>, %arg2: memref<8x36xbf16, #tpu.memory_space<vmem>>, %arg3: memref<8x1xf32, #tpu.memory_space<vmem>>, %arg4: memref<16x72xbf16, #tpu.memory_space<vmem>>, %arg5: memref<16x1xf32, #tpu.memory_space<vmem>>, %arg6: memref<8x16xbf16, #tpu.memory_space<vmem>>, %arg7: memref<8x1xf32, #tpu.memory_space<vmem>>, %arg8: memref<16x72xbf16, #tpu.memory_space<vmem>>, %arg9: memref<16x1xf32, #tpu.memory_space<vmem>>, %arg10: memref<24x16xbf16, #tpu.memory_space<vmem>>, %arg11: memref<24x1xf32, #tpu.memory_space<vmem>>, %arg12: memref<24x512xf32, #tpu.memory_space<vmem>>) attributes {dimension_semantics = [#tpu.dimension_semantics<arbitrary>], iteration_bounds = array<i64: 1>, scalar_prefetch = 0 : i64, scratch_operands = 0 : i64, tpu.core_type = #tpu.core_type<tc>, window_params = [{pipeline_mode = #tpu.pipeline_mode<synchronous>, transform_indices = @transform_0, window_bounds = array<i64: 4, 512>}, {pipeline_mode = #tpu.pipeline_mode<synchronous>, transform_indices = @transform_1, window_bounds = array<i64: 8, 36>}, {pipeline_mode = #tpu.pipeline_mode<synchronous>, transform_indices = @transform_2, window_bounds = array<i64: 8, 1>}, {pipeline_mode = #tpu.pipeline_mode<synchronous>, transform_indices = @transform_3, window_bounds = array<i64: 16, 72>}, {pipeline_mode = #tpu.pipeline_mode<synchronous>, transform_indices = @transform_4, window_bounds = array<i64: 16, 1>}, {pipeline_mode = #tpu.pipeline_mode<synchronous>, transform_indices = @transform_5, window_bounds = array<i64: 8, 16>}, {pipeline_mode = #tpu.pipeline_mode<synchronous>, transform_indices = @transform_6, window_bounds = array<i64: 8, 1>}, {pipeline_mode = #tpu.pipeline_mode<synchronous>, transform_indices = @transform_7, window_bounds = array<i64: 16, 72>}, {pipeline_mode = #tpu.pipeline_mode<synchronous>, transform_indices = @transform_8, window_bounds = array<i64: 16, 1>}, {pipeline_mode = #tpu.pipeline_mode<synchronous>, transform_indices = @transform_9, window_bounds = array<i64: 24, 16>}, {pipeline_mode = #tpu.pipeline_mode<synchronous>, transform_indices = @transform_10, window_bounds = array<i64: 24, 1>}, {pipeline_mode = #tpu.pipeline_mode<synchronous>, transform_indices = @transform_11, window_bounds = array<i64: 24, 512>}]} {
    %0 = tpu.iota {dimensions = array<i32: 1>} : vector<1x512xi32>
    %c255_i32 = arith.constant 255 : i32
    %1 = vector.broadcast %c255_i32 : i32 to vector<1x512xi32>
    %2 = arith.andi %0, %1 : vector<1x512xi32>
    %c4_i32 = arith.constant 4 : i32
    %3 = vector.broadcast %c4_i32 : i32 to vector<1x512xi32>
    %4 = arith.shrsi %2, %3 : vector<1x512xi32>
    %c15_i32 = arith.constant 15 : i32
    %5 = vector.broadcast %c15_i32 : i32 to vector<1x512xi32>
    %6 = arith.andi %2, %5 : vector<1x512xi32>
    %c1_i32 = arith.constant 1 : i32
    %7 = vector.broadcast %c1_i32 : i32 to vector<1x512xi32>
    %8 = arith.cmpi sge, %4, %7 : vector<1x512xi32>
    %c14_i32 = arith.constant 14 : i32
    %9 = vector.broadcast %c14_i32 : i32 to vector<1x512xi32>
    %10 = arith.cmpi sle, %4, %9 : vector<1x512xi32>
    %c1_i32_0 = arith.constant 1 : i32
    %11 = vector.broadcast %c1_i32_0 : i32 to vector<1x512xi32>
    %12 = arith.cmpi sge, %6, %11 : vector<1x512xi32>
    %c14_i32_1 = arith.constant 14 : i32
    %13 = vector.broadcast %c14_i32_1 : i32 to vector<1x512xi32>
    %14 = arith.cmpi sle, %6, %13 : vector<1x512xi32>
    %c0 = arith.constant 0 : index
    %c0_2 = arith.constant 0 : index
    %15 = vector.load %arg1[%c0, %c0_2] : memref<4x512xf32, #tpu.memory_space<vmem>>, vector<4x512xf32>
    %c17_i32 = arith.constant 17 : i32
    %16 = tpu.dynamic_rotate %15 by %c17_i32 dim 1 : vector<4x512xf32>, i32 -> vector<4x512xf32>
    %17 = arith.andi %8, %12 : vector<1x512xi1>
    %cst = arith.constant 0.000000e+00 : f32
    %18 = vector.broadcast %cst : f32 to vector<4x512xf32>
    %19 = vector.shape_cast %17 : vector<1x512xi1> to vector<1x512xi1>
    %20 = vector.broadcast %19 : vector<1x512xi1> to vector<4x512xi1>
    %21 = arith.select %20, %16, %18 : vector<4x512xi1>, vector<4x512xf32>
    %c16_i32 = arith.constant 16 : i32
    %22 = tpu.dynamic_rotate %15 by %c16_i32 dim 1 : vector<4x512xf32>, i32 -> vector<4x512xf32>
    %cst_3 = arith.constant 0.000000e+00 : f32
    %23 = vector.broadcast %cst_3 : f32 to vector<4x512xf32>
    %24 = vector.shape_cast %8 : vector<1x512xi1> to vector<1x512xi1>
    %25 = vector.broadcast %24 : vector<1x512xi1> to vector<4x512xi1>
    %26 = arith.select %25, %22, %23 : vector<4x512xi1>, vector<4x512xf32>
    %c15_i32_4 = arith.constant 15 : i32
    %27 = tpu.dynamic_rotate %15 by %c15_i32_4 dim 1 : vector<4x512xf32>, i32 -> vector<4x512xf32>
    %28 = arith.andi %8, %14 : vector<1x512xi1>
    %cst_5 = arith.constant 0.000000e+00 : f32
    %29 = vector.broadcast %cst_5 : f32 to vector<4x512xf32>
    %30 = vector.shape_cast %28 : vector<1x512xi1> to vector<1x512xi1>
    %31 = vector.broadcast %30 : vector<1x512xi1> to vector<4x512xi1>
    %32 = arith.select %31, %27, %29 : vector<4x512xi1>, vector<4x512xf32>
    %c1_i32_6 = arith.constant 1 : i32
    %33 = tpu.dynamic_rotate %15 by %c1_i32_6 dim 1 : vector<4x512xf32>, i32 -> vector<4x512xf32>
    %cst_7 = arith.constant 0.000000e+00 : f32
    %34 = vector.broadcast %cst_7 : f32 to vector<4x512xf32>
    %35 = vector.shape_cast %12 : vector<1x512xi1> to vector<1x512xi1>
    %36 = vector.broadcast %35 : vector<1x512xi1> to vector<4x512xi1>
    %37 = arith.select %36, %33, %34 : vector<4x512xi1>, vector<4x512xf32>
    %c511_i32 = arith.constant 511 : i32
    %38 = tpu.dynamic_rotate %15 by %c511_i32 dim 1 : vector<4x512xf32>, i32 -> vector<4x512xf32>
    %cst_8 = arith.constant 0.000000e+00 : f32
    %39 = vector.broadcast %cst_8 : f32 to vector<4x512xf32>
    %40 = vector.shape_cast %14 : vector<1x512xi1> to vector<1x512xi1>
    %41 = vector.broadcast %40 : vector<1x512xi1> to vector<4x512xi1>
    %42 = arith.select %41, %38, %39 : vector<4x512xi1>, vector<4x512xf32>
    %c497_i32 = arith.constant 497 : i32
    %43 = tpu.dynamic_rotate %15 by %c497_i32 dim 1 : vector<4x512xf32>, i32 -> vector<4x512xf32>
    %44 = arith.andi %10, %12 : vector<1x512xi1>
    %cst_9 = arith.constant 0.000000e+00 : f32
    %45 = vector.broadcast %cst_9 : f32 to vector<4x512xf32>
    %46 = vector.shape_cast %44 : vector<1x512xi1> to vector<1x512xi1>
    %47 = vector.broadcast %46 : vector<1x512xi1> to vector<4x512xi1>
    %48 = arith.select %47, %43, %45 : vector<4x512xi1>, vector<4x512xf32>
    %c496_i32 = arith.constant 496 : i32
    %49 = tpu.dynamic_rotate %15 by %c496_i32 dim 1 : vector<4x512xf32>, i32 -> vector<4x512xf32>
    %cst_10 = arith.constant 0.000000e+00 : f32
    %50 = vector.broadcast %cst_10 : f32 to vector<4x512xf32>
    %51 = vector.shape_cast %10 : vector<1x512xi1> to vector<1x512xi1>
    %52 = vector.broadcast %51 : vector<1x512xi1> to vector<4x512xi1>
    %53 = arith.select %52, %49, %50 : vector<4x512xi1>, vector<4x512xf32>
    %c495_i32 = arith.constant 495 : i32
    %54 = tpu.dynamic_rotate %15 by %c495_i32 dim 1 : vector<4x512xf32>, i32 -> vector<4x512xf32>
    %55 = arith.andi %10, %14 : vector<1x512xi1>
    %cst_11 = arith.constant 0.000000e+00 : f32
    %56 = vector.broadcast %cst_11 : f32 to vector<4x512xf32>
    %57 = vector.shape_cast %55 : vector<1x512xi1> to vector<1x512xi1>
    %58 = vector.broadcast %57 : vector<1x512xi1> to vector<4x512xi1>
    %59 = arith.select %58, %54, %56 : vector<4x512xi1>, vector<4x512xf32>
    %60 = tpu.concatenate %21, %26, %32, %37, %15, %42, %48, %53, %59 in 0 : vector<4x512xf32>, vector<4x512xf32>, vector<4x512xf32>, vector<4x512xf32>, vector<4x512xf32>, vector<4x512xf32>, vector<4x512xf32>, vector<4x512xf32>, vector<4x512xf32> -> vector<36x512xf32>
    %61 = arith.truncf %60 : vector<36x512xf32> to vector<36x512xbf16>
    %c0_12 = arith.constant 0 : index
    %c0_13 = arith.constant 0 : index
    %62 = vector.load %arg2[%c0_12, %c0_13] : memref<8x36xbf16, #tpu.memory_space<vmem>>, vector<8x36xbf16>
    %cst_14 = arith.constant dense<0.000000e+00> : vector<8x512xf32>
    %63 = tpu.matmul %62, %61, %cst_14 {dimension_numbers = #tpu.dot_dimension_numbers<[1], [0], [0], [1], [0, 0, 1, 1], [], []>} : vector<8x36xbf16>, vector<36x512xbf16>, vector<8x512xf32> -> vector<8x512xf32>
    %c0_15 = arith.constant 0 : index
    %c0_16 = arith.constant 0 : index
    %64 = vector.load %arg3[%c0_15, %c0_16] : memref<8x1xf32, #tpu.memory_space<vmem>>, vector<8x1xf32>
    %65 = vector.broadcast %64 : vector<8x1xf32> to vector<8x512xf32>
    %66 = arith.addf %63, %65 : vector<8x512xf32>
    %cst_17 = arith.constant 1.000000e-01 : f32
    %67 = vector.broadcast %cst_17 : f32 to vector<8x512xf32>
    %68 = arith.mulf %67, %66 : vector<8x512xf32>
    %69 = arith.maximumf %66, %68 : vector<8x512xf32>
    %c17_i32_18 = arith.constant 17 : i32
    %70 = tpu.dynamic_rotate %69 by %c17_i32_18 dim 1 : vector<8x512xf32>, i32 -> vector<8x512xf32>
    %71 = arith.andi %8, %12 : vector<1x512xi1>
    %cst_19 = arith.constant 0.000000e+00 : f32
    %72 = vector.broadcast %cst_19 : f32 to vector<8x512xf32>
    %73 = vector.shape_cast %71 : vector<1x512xi1> to vector<1x512xi1>
    %74 = vector.broadcast %73 : vector<1x512xi1> to vector<8x512xi1>
    %75 = arith.select %74, %70, %72 : vector<8x512xi1>, vector<8x512xf32>
    %c16_i32_20 = arith.constant 16 : i32
    %76 = tpu.dynamic_rotate %69 by %c16_i32_20 dim 1 : vector<8x512xf32>, i32 -> vector<8x512xf32>
    %cst_21 = arith.constant 0.000000e+00 : f32
    %77 = vector.broadcast %cst_21 : f32 to vector<8x512xf32>
    %78 = vector.shape_cast %8 : vector<1x512xi1> to vector<1x512xi1>
    %79 = vector.broadcast %78 : vector<1x512xi1> to vector<8x512xi1>
    %80 = arith.select %79, %76, %77 : vector<8x512xi1>, vector<8x512xf32>
    %c15_i32_22 = arith.constant 15 : i32
    %81 = tpu.dynamic_rotate %69 by %c15_i32_22 dim 1 : vector<8x512xf32>, i32 -> vector<8x512xf32>
    %82 = arith.andi %8, %14 : vector<1x512xi1>
    %cst_23 = arith.constant 0.000000e+00 : f32
    %83 = vector.broadcast %cst_23 : f32 to vector<8x512xf32>
    %84 = vector.shape_cast %82 : vector<1x512xi1> to vector<1x512xi1>
    %85 = vector.broadcast %84 : vector<1x512xi1> to vector<8x512xi1>
    %86 = arith.select %85, %81, %83 : vector<8x512xi1>, vector<8x512xf32>
    %c1_i32_24 = arith.constant 1 : i32
    %87 = tpu.dynamic_rotate %69 by %c1_i32_24 dim 1 : vector<8x512xf32>, i32 -> vector<8x512xf32>
    %cst_25 = arith.constant 0.000000e+00 : f32
    %88 = vector.broadcast %cst_25 : f32 to vector<8x512xf32>
    %89 = vector.shape_cast %12 : vector<1x512xi1> to vector<1x512xi1>
    %90 = vector.broadcast %89 : vector<1x512xi1> to vector<8x512xi1>
    %91 = arith.select %90, %87, %88 : vector<8x512xi1>, vector<8x512xf32>
    %c511_i32_26 = arith.constant 511 : i32
    %92 = tpu.dynamic_rotate %69 by %c511_i32_26 dim 1 : vector<8x512xf32>, i32 -> vector<8x512xf32>
    %cst_27 = arith.constant 0.000000e+00 : f32
    %93 = vector.broadcast %cst_27 : f32 to vector<8x512xf32>
    %94 = vector.shape_cast %14 : vector<1x512xi1> to vector<1x512xi1>
    %95 = vector.broadcast %94 : vector<1x512xi1> to vector<8x512xi1>
    %96 = arith.select %95, %92, %93 : vector<8x512xi1>, vector<8x512xf32>
    %c497_i32_28 = arith.constant 497 : i32
    %97 = tpu.dynamic_rotate %69 by %c497_i32_28 dim 1 : vector<8x512xf32>, i32 -> vector<8x512xf32>
    %98 = arith.andi %10, %12 : vector<1x512xi1>
    %cst_29 = arith.constant 0.000000e+00 : f32
    %99 = vector.broadcast %cst_29 : f32 to vector<8x512xf32>
    %100 = vector.shape_cast %98 : vector<1x512xi1> to vector<1x512xi1>
    %101 = vector.broadcast %100 : vector<1x512xi1> to vector<8x512xi1>
    %102 = arith.select %101, %97, %99 : vector<8x512xi1>, vector<8x512xf32>
    %c496_i32_30 = arith.constant 496 : i32
    %103 = tpu.dynamic_rotate %69 by %c496_i32_30 dim 1 : vector<8x512xf32>, i32 -> vector<8x512xf32>
    %cst_31 = arith.constant 0.000000e+00 : f32
    %104 = vector.broadcast %cst_31 : f32 to vector<8x512xf32>
    %105 = vector.shape_cast %10 : vector<1x512xi1> to vector<1x512xi1>
    %106 = vector.broadcast %105 : vector<1x512xi1> to vector<8x512xi1>
    %107 = arith.select %106, %103, %104 : vector<8x512xi1>, vector<8x512xf32>
    %c495_i32_32 = arith.constant 495 : i32
    %108 = tpu.dynamic_rotate %69 by %c495_i32_32 dim 1 : vector<8x512xf32>, i32 -> vector<8x512xf32>
    %109 = arith.andi %10, %14 : vector<1x512xi1>
    %cst_33 = arith.constant 0.000000e+00 : f32
    %110 = vector.broadcast %cst_33 : f32 to vector<8x512xf32>
    %111 = vector.shape_cast %109 : vector<1x512xi1> to vector<1x512xi1>
    %112 = vector.broadcast %111 : vector<1x512xi1> to vector<8x512xi1>
    %113 = arith.select %112, %108, %110 : vector<8x512xi1>, vector<8x512xf32>
    %114 = tpu.concatenate %75, %80, %86, %91, %69, %96, %102, %107, %113 in 0 : vector<8x512xf32>, vector<8x512xf32>, vector<8x512xf32>, vector<8x512xf32>, vector<8x512xf32>, vector<8x512xf32>, vector<8x512xf32>, vector<8x512xf32>, vector<8x512xf32> -> vector<72x512xf32>
    %115 = arith.truncf %114 : vector<72x512xf32> to vector<72x512xbf16>
    %c0_34 = arith.constant 0 : index
    %c0_35 = arith.constant 0 : index
    %116 = vector.load %arg4[%c0_34, %c0_35] : memref<16x72xbf16, #tpu.memory_space<vmem>>, vector<16x72xbf16>
    %cst_36 = arith.constant dense<0.000000e+00> : vector<16x512xf32>
    %117 = tpu.matmul %116, %115, %cst_36 {dimension_numbers = #tpu.dot_dimension_numbers<[1], [0], [0], [1], [0, 0, 1, 1], [], []>} : vector<16x72xbf16>, vector<72x512xbf16>, vector<16x512xf32> -> vector<16x512xf32>
    %c0_37 = arith.constant 0 : index
    %c0_38 = arith.constant 0 : index
    %118 = vector.load %arg5[%c0_37, %c0_38] : memref<16x1xf32, #tpu.memory_space<vmem>>, vector<16x1xf32>
    %119 = vector.broadcast %118 : vector<16x1xf32> to vector<16x512xf32>
    %120 = arith.addf %117, %119 : vector<16x512xf32>
    %cst_39 = arith.constant 1.000000e-01 : f32
    %121 = vector.broadcast %cst_39 : f32 to vector<16x512xf32>
    %122 = arith.mulf %121, %120 : vector<16x512xf32>
    %123 = arith.maximumf %120, %122 : vector<16x512xf32>
    %c0_40 = arith.constant 0 : index
    %c0_41 = arith.constant 0 : index
    %124 = vector.load %arg6[%c0_40, %c0_41] : memref<8x16xbf16, #tpu.memory_space<vmem>>, vector<8x16xbf16>
    %125 = arith.truncf %123 : vector<16x512xf32> to vector<16x512xbf16>
    %cst_42 = arith.constant dense<0.000000e+00> : vector<8x512xf32>
    %126 = tpu.matmul %124, %125, %cst_42 {dimension_numbers = #tpu.dot_dimension_numbers<[1], [0], [0], [1], [0, 0, 1, 1], [], []>} : vector<8x16xbf16>, vector<16x512xbf16>, vector<8x512xf32> -> vector<8x512xf32>
    %c0_43 = arith.constant 0 : index
    %c0_44 = arith.constant 0 : index
    %127 = vector.load %arg7[%c0_43, %c0_44] : memref<8x1xf32, #tpu.memory_space<vmem>>, vector<8x1xf32>
    %128 = vector.broadcast %127 : vector<8x1xf32> to vector<8x512xf32>
    %129 = arith.addf %126, %128 : vector<8x512xf32>
    %cst_45 = arith.constant 1.000000e-01 : f32
    %130 = vector.broadcast %cst_45 : f32 to vector<8x512xf32>
    %131 = arith.mulf %130, %129 : vector<8x512xf32>
    %132 = arith.maximumf %129, %131 : vector<8x512xf32>
    %c17_i32_46 = arith.constant 17 : i32
    %133 = tpu.dynamic_rotate %132 by %c17_i32_46 dim 1 : vector<8x512xf32>, i32 -> vector<8x512xf32>
    %134 = arith.andi %8, %12 : vector<1x512xi1>
    %cst_47 = arith.constant 0.000000e+00 : f32
    %135 = vector.broadcast %cst_47 : f32 to vector<8x512xf32>
    %136 = vector.shape_cast %134 : vector<1x512xi1> to vector<1x512xi1>
    %137 = vector.broadcast %136 : vector<1x512xi1> to vector<8x512xi1>
    %138 = arith.select %137, %133, %135 : vector<8x512xi1>, vector<8x512xf32>
    %c16_i32_48 = arith.constant 16 : i32
    %139 = tpu.dynamic_rotate %132 by %c16_i32_48 dim 1 : vector<8x512xf32>, i32 -> vector<8x512xf32>
    %cst_49 = arith.constant 0.000000e+00 : f32
    %140 = vector.broadcast %cst_49 : f32 to vector<8x512xf32>
    %141 = vector.shape_cast %8 : vector<1x512xi1> to vector<1x512xi1>
    %142 = vector.broadcast %141 : vector<1x512xi1> to vector<8x512xi1>
    %143 = arith.select %142, %139, %140 : vector<8x512xi1>, vector<8x512xf32>
    %c15_i32_50 = arith.constant 15 : i32
    %144 = tpu.dynamic_rotate %132 by %c15_i32_50 dim 1 : vector<8x512xf32>, i32 -> vector<8x512xf32>
    %145 = arith.andi %8, %14 : vector<1x512xi1>
    %cst_51 = arith.constant 0.000000e+00 : f32
    %146 = vector.broadcast %cst_51 : f32 to vector<8x512xf32>
    %147 = vector.shape_cast %145 : vector<1x512xi1> to vector<1x512xi1>
    %148 = vector.broadcast %147 : vector<1x512xi1> to vector<8x512xi1>
    %149 = arith.select %148, %144, %146 : vector<8x512xi1>, vector<8x512xf32>
    %c1_i32_52 = arith.constant 1 : i32
    %150 = tpu.dynamic_rotate %132 by %c1_i32_52 dim 1 : vector<8x512xf32>, i32 -> vector<8x512xf32>
    %cst_53 = arith.constant 0.000000e+00 : f32
    %151 = vector.broadcast %cst_53 : f32 to vector<8x512xf32>
    %152 = vector.shape_cast %12 : vector<1x512xi1> to vector<1x512xi1>
    %153 = vector.broadcast %152 : vector<1x512xi1> to vector<8x512xi1>
    %154 = arith.select %153, %150, %151 : vector<8x512xi1>, vector<8x512xf32>
    %c511_i32_54 = arith.constant 511 : i32
    %155 = tpu.dynamic_rotate %132 by %c511_i32_54 dim 1 : vector<8x512xf32>, i32 -> vector<8x512xf32>
    %cst_55 = arith.constant 0.000000e+00 : f32
    %156 = vector.broadcast %cst_55 : f32 to vector<8x512xf32>
    %157 = vector.shape_cast %14 : vector<1x512xi1> to vector<1x512xi1>
    %158 = vector.broadcast %157 : vector<1x512xi1> to vector<8x512xi1>
    %159 = arith.select %158, %155, %156 : vector<8x512xi1>, vector<8x512xf32>
    %c497_i32_56 = arith.constant 497 : i32
    %160 = tpu.dynamic_rotate %132 by %c497_i32_56 dim 1 : vector<8x512xf32>, i32 -> vector<8x512xf32>
    %161 = arith.andi %10, %12 : vector<1x512xi1>
    %cst_57 = arith.constant 0.000000e+00 : f32
    %162 = vector.broadcast %cst_57 : f32 to vector<8x512xf32>
    %163 = vector.shape_cast %161 : vector<1x512xi1> to vector<1x512xi1>
    %164 = vector.broadcast %163 : vector<1x512xi1> to vector<8x512xi1>
    %165 = arith.select %164, %160, %162 : vector<8x512xi1>, vector<8x512xf32>
    %c496_i32_58 = arith.constant 496 : i32
    %166 = tpu.dynamic_rotate %132 by %c496_i32_58 dim 1 : vector<8x512xf32>, i32 -> vector<8x512xf32>
    %cst_59 = arith.constant 0.000000e+00 : f32
    %167 = vector.broadcast %cst_59 : f32 to vector<8x512xf32>
    %168 = vector.shape_cast %10 : vector<1x512xi1> to vector<1x512xi1>
    %169 = vector.broadcast %168 : vector<1x512xi1> to vector<8x512xi1>
    %170 = arith.select %169, %166, %167 : vector<8x512xi1>, vector<8x512xf32>
    %c495_i32_60 = arith.constant 495 : i32
    %171 = tpu.dynamic_rotate %132 by %c495_i32_60 dim 1 : vector<8x512xf32>, i32 -> vector<8x512xf32>
    %172 = arith.andi %10, %14 : vector<1x512xi1>
    %cst_61 = arith.constant 0.000000e+00 : f32
    %173 = vector.broadcast %cst_61 : f32 to vector<8x512xf32>
    %174 = vector.shape_cast %172 : vector<1x512xi1> to vector<1x512xi1>
    %175 = vector.broadcast %174 : vector<1x512xi1> to vector<8x512xi1>
    %176 = arith.select %175, %171, %173 : vector<8x512xi1>, vector<8x512xf32>
    %177 = tpu.concatenate %138, %143, %149, %154, %132, %159, %165, %170, %176 in 0 : vector<8x512xf32>, vector<8x512xf32>, vector<8x512xf32>, vector<8x512xf32>, vector<8x512xf32>, vector<8x512xf32>, vector<8x512xf32>, vector<8x512xf32>, vector<8x512xf32> -> vector<72x512xf32>
    %178 = arith.truncf %177 : vector<72x512xf32> to vector<72x512xbf16>
    %c0_62 = arith.constant 0 : index
    %c0_63 = arith.constant 0 : index
    %179 = vector.load %arg8[%c0_62, %c0_63] : memref<16x72xbf16, #tpu.memory_space<vmem>>, vector<16x72xbf16>
    %cst_64 = arith.constant dense<0.000000e+00> : vector<16x512xf32>
    %180 = tpu.matmul %179, %178, %cst_64 {dimension_numbers = #tpu.dot_dimension_numbers<[1], [0], [0], [1], [0, 0, 1, 1], [], []>} : vector<16x72xbf16>, vector<72x512xbf16>, vector<16x512xf32> -> vector<16x512xf32>
    %c0_65 = arith.constant 0 : index
    %c0_66 = arith.constant 0 : index
    %181 = vector.load %arg9[%c0_65, %c0_66] : memref<16x1xf32, #tpu.memory_space<vmem>>, vector<16x1xf32>
    %182 = vector.broadcast %181 : vector<16x1xf32> to vector<16x512xf32>
    %183 = arith.addf %180, %182 : vector<16x512xf32>
    %cst_67 = arith.constant 1.000000e-01 : f32
    %184 = vector.broadcast %cst_67 : f32 to vector<16x512xf32>
    %185 = arith.mulf %184, %183 : vector<16x512xf32>
    %186 = arith.maximumf %183, %185 : vector<16x512xf32>
    %187 = arith.addf %186, %123 : vector<16x512xf32>
    %c0_68 = arith.constant 0 : index
    %c0_69 = arith.constant 0 : index
    %188 = vector.load %arg10[%c0_68, %c0_69] : memref<24x16xbf16, #tpu.memory_space<vmem>>, vector<24x16xbf16>
    %189 = arith.truncf %187 : vector<16x512xf32> to vector<16x512xbf16>
    %cst_70 = arith.constant dense<0.000000e+00> : vector<24x512xf32>
    %190 = tpu.matmul %188, %189, %cst_70 {dimension_numbers = #tpu.dot_dimension_numbers<[1], [0], [0], [1], [0, 0, 1, 1], [], []>} : vector<24x16xbf16>, vector<16x512xbf16>, vector<24x512xf32> -> vector<24x512xf32>
    %c0_71 = arith.constant 0 : index
    %c0_72 = arith.constant 0 : index
    %191 = vector.load %arg11[%c0_71, %c0_72] : memref<24x1xf32, #tpu.memory_space<vmem>>, vector<24x1xf32>
    %192 = vector.broadcast %191 : vector<24x1xf32> to vector<24x512xf32>
    %193 = arith.addf %190, %192 : vector<24x512xf32>
    %194 = tpu.iota {dimensions = array<i32: 0>} : vector<24x1xi32>
    %cst_73 = arith.constant 0.000000e+00 : f32
    %195 = vector.broadcast %cst_73 : f32 to vector<24x1xf32>
    %c0_i32 = arith.constant 0 : i32
    %196 = vector.broadcast %c0_i32 : i32 to vector<24x1xi32>
    %197 = arith.cmpi eq, %194, %196 : vector<24x1xi32>
    %c1_i32_74 = arith.constant 1 : i32
    %198 = vector.broadcast %c1_i32_74 : i32 to vector<24x1xi32>
    %199 = arith.cmpi eq, %194, %198 : vector<24x1xi32>
    %c2_i32 = arith.constant 2 : i32
    %200 = vector.broadcast %c2_i32 : i32 to vector<24x1xi32>
    %201 = arith.cmpi eq, %194, %200 : vector<24x1xi32>
    %c3_i32 = arith.constant 3 : i32
    %202 = vector.broadcast %c3_i32 : i32 to vector<24x1xi32>
    %203 = arith.cmpi eq, %194, %202 : vector<24x1xi32>
    %cst_75 = arith.constant 1.400000e+01 : f32
    %204 = vector.broadcast %cst_75 : f32 to vector<24x1xf32>
    %205 = arith.select %201, %204, %195 : vector<24x1xi1>, vector<24x1xf32>
    %cst_76 = arith.constant 1.000000e+01 : f32
    %206 = vector.broadcast %cst_76 : f32 to vector<24x1xf32>
    %207 = arith.select %203, %206, %205 : vector<24x1xi1>, vector<24x1xf32>
    %c8_i32 = arith.constant 8 : i32
    %208 = vector.broadcast %c8_i32 : i32 to vector<24x1xi32>
    %209 = arith.cmpi eq, %194, %208 : vector<24x1xi32>
    %c9_i32 = arith.constant 9 : i32
    %210 = vector.broadcast %c9_i32 : i32 to vector<24x1xi32>
    %211 = arith.cmpi eq, %194, %210 : vector<24x1xi32>
    %c10_i32 = arith.constant 10 : i32
    %212 = vector.broadcast %c10_i32 : i32 to vector<24x1xi32>
    %213 = arith.cmpi eq, %194, %212 : vector<24x1xi32>
    %c11_i32 = arith.constant 11 : i32
    %214 = vector.broadcast %c11_i32 : i32 to vector<24x1xi32>
    %215 = arith.cmpi eq, %194, %214 : vector<24x1xi32>
    %216 = arith.ori %197, %209 : vector<24x1xi1>
    %217 = arith.ori %199, %211 : vector<24x1xi1>
    %218 = arith.ori %201, %213 : vector<24x1xi1>
    %219 = arith.ori %203, %215 : vector<24x1xi1>
    %cst_77 = arith.constant 2.700000e+01 : f32
    %220 = vector.broadcast %cst_77 : f32 to vector<24x1xf32>
    %221 = arith.select %213, %220, %207 : vector<24x1xi1>, vector<24x1xf32>
    %cst_78 = arith.constant 2.300000e+01 : f32
    %222 = vector.broadcast %cst_78 : f32 to vector<24x1xf32>
    %223 = arith.select %215, %222, %221 : vector<24x1xi1>, vector<24x1xf32>
    %c16_i32_79 = arith.constant 16 : i32
    %224 = vector.broadcast %c16_i32_79 : i32 to vector<24x1xi32>
    %225 = arith.cmpi eq, %194, %224 : vector<24x1xi32>
    %c17_i32_80 = arith.constant 17 : i32
    %226 = vector.broadcast %c17_i32_80 : i32 to vector<24x1xi32>
    %227 = arith.cmpi eq, %194, %226 : vector<24x1xi32>
    %c18_i32 = arith.constant 18 : i32
    %228 = vector.broadcast %c18_i32 : i32 to vector<24x1xi32>
    %229 = arith.cmpi eq, %194, %228 : vector<24x1xi32>
    %c19_i32 = arith.constant 19 : i32
    %230 = vector.broadcast %c19_i32 : i32 to vector<24x1xi32>
    %231 = arith.cmpi eq, %194, %230 : vector<24x1xi32>
    %232 = arith.ori %216, %225 : vector<24x1xi1>
    %233 = arith.ori %217, %227 : vector<24x1xi1>
    %234 = arith.ori %218, %229 : vector<24x1xi1>
    %235 = arith.ori %219, %231 : vector<24x1xi1>
    %cst_81 = arith.constant 5.800000e+01 : f32
    %236 = vector.broadcast %cst_81 : f32 to vector<24x1xf32>
    %237 = arith.select %229, %236, %223 : vector<24x1xi1>, vector<24x1xf32>
    %cst_82 = arith.constant 3.700000e+01 : f32
    %238 = vector.broadcast %cst_82 : f32 to vector<24x1xf32>
    %239 = arith.select %231, %238, %237 : vector<24x1xi1>, vector<24x1xf32>
    %240 = arith.ori %232, %233 : vector<24x1xi1>
    %241 = arith.ori %234, %235 : vector<24x1xi1>
    %cst_83 = arith.constant 0.000000e+00 : f32
    %242 = vector.broadcast %cst_83 : f32 to vector<24x512xf32>
    %243 = arith.subf %242, %193 : vector<24x512xf32>
    %244 = math.exp %243 : vector<24x512xf32>
    %cst_84 = arith.constant 1.000000e+00 : f32
    %245 = vector.broadcast %cst_84 : f32 to vector<24x512xf32>
    %246 = arith.addf %245, %244 : vector<24x512xf32>
    %cst_85 = arith.constant 1.000000e+00 : f32
    %247 = vector.broadcast %cst_85 : f32 to vector<24x512xf32>
    %248 = arith.divf %247, %246 : vector<24x512xf32>
    %249 = math.exp %193 : vector<24x512xf32>
    %250 = vector.broadcast %239 : vector<24x1xf32> to vector<24x512xf32>
    %251 = arith.mulf %249, %250 : vector<24x512xf32>
    %252 = vector.extract_strided_slice %251 {offsets = [2, 0], sizes = [22, 512], strides = [1, 1]} : vector<24x512xf32> to vector<22x512xf32>
    %253 = vector.extract_strided_slice %251 {offsets = [0, 0], sizes = [2, 512], strides = [1, 1]} : vector<24x512xf32> to vector<2x512xf32>
    %254 = tpu.concatenate %252, %253 in 0 : vector<22x512xf32>, vector<2x512xf32> -> vector<24x512xf32>
    %255 = arith.sitofp %4 : vector<1x512xi32> to vector<1x512xf32>
    %256 = arith.sitofp %6 : vector<1x512xi32> to vector<1x512xf32>
    %cst_86 = arith.constant 0.000000e+00 : f32
    %257 = vector.shape_cast %233 : vector<24x1xi1> to vector<24x1xi1>
    %258 = vector.broadcast %257 : vector<24x1xi1> to vector<24x512xi1>
    %259 = vector.shape_cast %256 : vector<1x512xf32> to vector<1x512xf32>
    %260 = vector.broadcast %259 : vector<1x512xf32> to vector<24x512xf32>
    %261 = vector.broadcast %cst_86 : f32 to vector<24x512xf32>
    %262 = arith.select %258, %260, %261 : vector<24x512xi1>, vector<24x512xf32>
    %263 = vector.shape_cast %232 : vector<24x1xi1> to vector<24x1xi1>
    %264 = vector.broadcast %263 : vector<24x1xi1> to vector<24x512xi1>
    %265 = vector.shape_cast %255 : vector<1x512xf32> to vector<1x512xf32>
    %266 = vector.broadcast %265 : vector<1x512xf32> to vector<24x512xf32>
    %267 = arith.select %264, %266, %262 : vector<24x512xi1>, vector<24x512xf32>
    %cst_87 = arith.constant 1.000000e+00 : f32
    %cst_88 = arith.constant 1.000000e+00 : f32
    %268 = vector.broadcast %cst_87 : f32 to vector<24x1xf32>
    %269 = vector.broadcast %cst_88 : f32 to vector<24x1xf32>
    %270 = arith.select %232, %268, %269 : vector<24x1xi1>, vector<24x1xf32>
    %271 = arith.addf %248, %267 : vector<24x512xf32>
    %272 = vector.broadcast %270 : vector<24x1xf32> to vector<24x512xf32>
    %273 = arith.mulf %271, %272 : vector<24x512xf32>
    %cst_89 = arith.constant 5.000000e-01 : f32
    %274 = vector.broadcast %cst_89 : f32 to vector<24x512xf32>
    %275 = arith.mulf %274, %254 : vector<24x512xf32>
    %276 = arith.subf %273, %275 : vector<24x512xf32>
    %277 = vector.shape_cast %241 : vector<24x1xi1> to vector<24x1xi1>
    %278 = vector.broadcast %277 : vector<24x1xi1> to vector<24x512xi1>
    %279 = arith.select %278, %251, %248 : vector<24x512xi1>, vector<24x512xf32>
    %280 = vector.shape_cast %240 : vector<24x1xi1> to vector<24x1xi1>
    %281 = vector.broadcast %280 : vector<24x1xi1> to vector<24x512xi1>
    %282 = arith.select %281, %276, %279 : vector<24x512xi1>, vector<24x512xf32>
    %c0_90 = arith.constant 0 : index
    %c0_91 = arith.constant 0 : index
    %283 = vector.load %arg12[%c0_90, %c0_91] : memref<24x512xf32, #tpu.memory_space<vmem>>, vector<24x512xf32>
    tpu.vector_store %arg12[%c0_90, %c0_91], %282 {strides = array<i32>} : memref<24x512xf32, #tpu.memory_space<vmem>>, vector<24x512xf32>,
    return
  }
  func.func @transform_0(%arg0: i32) -> (i32, i32) {
    %c0_i32 = arith.constant 0 : i32
    %c0_i32_0 = arith.constant 0 : i32
    %c0_i32_1 = arith.constant 0 : i32
    return %c0_i32, %c0_i32_0 : i32, i32
  }
  func.func @transform_1(%arg0: i32) -> (i32, i32) {
    %c0_i32 = arith.constant 0 : i32
    %c0_i32_0 = arith.constant 0 : i32
    %c0_i32_1 = arith.constant 0 : i32
    return %c0_i32, %c0_i32_0 : i32, i32
  }
  func.func @transform_2(%arg0: i32) -> (i32, i32) {
    %c0_i32 = arith.constant 0 : i32
    %c0_i32_0 = arith.constant 0 : i32
    %c0_i32_1 = arith.constant 0 : i32
    return %c0_i32, %c0_i32_0 : i32, i32
  }
  func.func @transform_3(%arg0: i32) -> (i32, i32) {
    %c0_i32 = arith.constant 0 : i32
    %c0_i32_0 = arith.constant 0 : i32
    %c0_i32_1 = arith.constant 0 : i32
    return %c0_i32, %c0_i32_0 : i32, i32
  }
  func.func @transform_4(%arg0: i32) -> (i32, i32) {
    %c0_i32 = arith.constant 0 : i32
    %c0_i32_0 = arith.constant 0 : i32
    %c0_i32_1 = arith.constant 0 : i32
    return %c0_i32, %c0_i32_0 : i32, i32
  }
  func.func @transform_5(%arg0: i32) -> (i32, i32) {
    %c0_i32 = arith.constant 0 : i32
    %c0_i32_0 = arith.constant 0 : i32
    %c0_i32_1 = arith.constant 0 : i32
    return %c0_i32, %c0_i32_0 : i32, i32
  }
  func.func @transform_6(%arg0: i32) -> (i32, i32) {
    %c0_i32 = arith.constant 0 : i32
    %c0_i32_0 = arith.constant 0 : i32
    %c0_i32_1 = arith.constant 0 : i32
    return %c0_i32, %c0_i32_0 : i32, i32
  }
  func.func @transform_7(%arg0: i32) -> (i32, i32) {
    %c0_i32 = arith.constant 0 : i32
    %c0_i32_0 = arith.constant 0 : i32
    %c0_i32_1 = arith.constant 0 : i32
    return %c0_i32, %c0_i32_0 : i32, i32
  }
  func.func @transform_8(%arg0: i32) -> (i32, i32) {
    %c0_i32 = arith.constant 0 : i32
    %c0_i32_0 = arith.constant 0 : i32
    %c0_i32_1 = arith.constant 0 : i32
    return %c0_i32, %c0_i32_0 : i32, i32
  }
  func.func @transform_9(%arg0: i32) -> (i32, i32) {
    %c0_i32 = arith.constant 0 : i32
    %c0_i32_0 = arith.constant 0 : i32
    %c0_i32_1 = arith.constant 0 : i32
    return %c0_i32, %c0_i32_0 : i32, i32
  }
  func.func @transform_10(%arg0: i32) -> (i32, i32) {
    %c0_i32 = arith.constant 0 : i32
    %c0_i32_0 = arith.constant 0 : i32
    %c0_i32_1 = arith.constant 0 : i32
    return %c0_i32, %c0_i32_0 : i32, i32
  }
  func.func @transform_11(%arg0: i32) -> (i32, i32) {
    %c0_i32 = arith.constant 0 : i32
    %c0_i32_0 = arith.constant 0 : i32
    %c0_i32_1 = arith.constant 0 : i32
    return %c0_i32, %c0_i32_0 : i32, i32
  }
}

</mosaic_0001>

<llo_original>
// kernel: _lambda_.1
$region0: #{_lambda_.1}
  #allocation0 [shape = 'u32[]', space=smem, size = 0x4, offset = 0x4, fixed_abs, tag = 'smem constant byte address 0x4 - core index']
  #allocation1 [shape = 'u32[144,128]{1,0:T(1,128)}', space=vmem, size = 0x12000, scoped, tag = 'internal scratch']
  %s0 = inlined_call_operand.vmem [shape: f32[4,512], index: 0, kind: input, shape index: {}]
  %s1 = inlined_call_operand.vmem [shape: bf16[8,36], index: 1, kind: input, shape index: {}]
  %s2 = inlined_call_operand.vmem [shape: f32[8,1], index: 2, kind: input, shape index: {}]
  %s3 = inlined_call_operand.vmem [shape: bf16[16,72], index: 3, kind: input, shape index: {}]
  %s4 = inlined_call_operand.vmem [shape: f32[16,1], index: 4, kind: input, shape index: {}]
  %s5 = inlined_call_operand.vmem [shape: bf16[8,16], index: 5, kind: input, shape index: {}]
  %s6 = inlined_call_operand.vmem [shape: f32[8,1], index: 6, kind: input, shape index: {}]
  %s7 = inlined_call_operand.vmem [shape: bf16[16,72], index: 7, kind: input, shape index: {}]
  %s8 = inlined_call_operand.vmem [shape: f32[16,1], index: 8, kind: input, shape index: {}]
  %s9 = inlined_call_operand.vmem [shape: bf16[24,16], index: 9, kind: input, shape index: {}]
  %s10 = inlined_call_operand.vmem [shape: f32[24,1], index: 10, kind: input, shape index: {}]
  %s11 = inlined_call_operand.vmem [shape: f32[24,512], index: 11, kind: output, shape index: {}]
  %s12 = sld [smem:[#allocation0]]
  $region54: #{_lambda_.1} parent=0
    _
  %s14 = ssub.s32 1, %s12
  %s15 = scalar_select 0, %s14, %s12
  // Predicated region
  $region2: #{_lambda_.1} parent=0 // pred_check
    _
  $region3: #{_lambda_.1} parent=0 // pred_check_branch
    %17 = sbr.rel (0) target = $region5
  $region4: #{_lambda_.1} parent=0 // pred_region
    _
  $region5: #{_lambda_.1} parent=0 // pred_fallthru
    _
  // Predicated region
  $region6: #{_lambda_.1} parent=0 // pred_check
    _
  $region7: #{_lambda_.1} parent=0 // pred_check_branch
    %19 = sbr.rel (0) target = $region9
  $region8: #{_lambda_.1} parent=0 // pred_region
    _
  $region9: #{_lambda_.1} parent=0 // pred_fallthru
    _
  // Predicated region
  $region10: #{_lambda_.1} parent=0 // pred_check
    _
  $region11: #{_lambda_.1} parent=0 // pred_check_branch
    %21 = sbr.rel (0) target = $region13
  $region12: #{_lambda_.1} parent=0 // pred_region
    _
  $region13: #{_lambda_.1} parent=0 // pred_fallthru
    _
  // Predicated region
  $region14: #{_lambda_.1} parent=0 // pred_check
    _
  $region15: #{_lambda_.1} parent=0 // pred_check_branch
    %23 = sbr.rel (0) target = $region17
  $region16: #{_lambda_.1} parent=0 // pred_region
    _
  $region17: #{_lambda_.1} parent=0 // pred_fallthru
    _
  // Predicated region
  $region18: #{_lambda_.1} parent=0 // pred_check
    _
  $region19: #{_lambda_.1} parent=0 // pred_check_branch
    %25 = sbr.rel (0) target = $region21
  $region20: #{_lambda_.1} parent=0 // pred_region
    _
  $region21: #{_lambda_.1} parent=0 // pred_fallthru
    _
  // Predicated region
  $region22: #{_lambda_.1} parent=0 // pred_check
    _
  $region23: #{_lambda_.1} parent=0 // pred_check_branch
    %27 = sbr.rel (0) target = $region25
  $region24: #{_lambda_.1} parent=0 // pred_region
    _
  $region25: #{_lambda_.1} parent=0 // pred_fallthru
    _
  // Predicated region
  $region26: #{_lambda_.1} parent=0 // pred_check
    _
  $region27: #{_lambda_.1} parent=0 // pred_check_branch
    %29 = sbr.rel (0) target = $region29
  $region28: #{_lambda_.1} parent=0 // pred_region
    _
  $region29: #{_lambda_.1} parent=0 // pred_fallthru
    _
  // Predicated region
  $region30: #{_lambda_.1} parent=0 // pred_check
    _
  $region31: #{_lambda_.1} parent=0 // pred_check_branch
    %31 = sbr.rel (0) target = $region33
  $region32: #{_lambda_.1} parent=0 // pred_region
    _
  $region33: #{_lambda_.1} parent=0 // pred_fallthru
    _
  // Predicated region
  $region34: #{_lambda_.1} parent=0 // pred_check
    _
  $region35: #{_lambda_.1} parent=0 // pred_check_branch
    %33 = sbr.rel (0) target = $region37
  $region36: #{_lambda_.1} parent=0 // pred_region
    _
  $region37: #{_lambda_.1} parent=0 // pred_fallthru
    _
  // Predicated region
  $region38: #{_lambda_.1} parent=0 // pred_check
    _
  $region39: #{_lambda_.1} parent=0 // pred_check_branch
    %35 = sbr.rel (0) target = $region41
  $region40: #{_lambda_.1} parent=0 // pred_region
    _
  $region41: #{_lambda_.1} parent=0 // pred_fallthru
    _
  // Predicated region
  $region42: #{_lambda_.1} parent=0 // pred_check
    _
  $region43: #{_lambda_.1} parent=0 // pred_check_branch
    %37 = sbr.rel (0) target = $region45
  $region44: #{_lambda_.1} parent=0 // pred_region
    _
  $region45: #{_lambda_.1} parent=0 // pred_fallthru
    _
  %v39 = vlaneseq
  %v40 = vand.u32 %v39, 127
  %v41 = vadd.s32 %v40, 128
  %v42 = vadd.s32 %v40, 256
  %v43 = vadd.s32 %v40, 384
  %v44 = vand.u32 %v40, 255
  %v45 = vand.u32 %v41, 255
  %v46 = vand.u32 %v42, 255
  %v47 = vand.u32 %v43, 255
  %v48 = vshra.s32 %v44, 4
  %v49 = vshra.s32 %v45, 4
  %v50 = vshra.s32 %v46, 4
  %v51 = vshra.s32 %v47, 4
  %v52 = vand.u32 %v44, 15
  %v53 = vand.u32 %v45, 15
  %v54 = vand.u32 %v46, 15
  %v55 = vand.u32 %v47, 15
  %vm56 = vcmp.ge.s32.totalorder %v48, 1
  %vm57 = vcmp.ge.s32.totalorder %v49, 1
  %vm58 = vcmp.ge.s32.totalorder %v50, 1
  %vm59 = vcmp.ge.s32.totalorder %v51, 1
  %vm60 = vcmp.le.s32.totalorder %v48, 14
  %vm61 = vcmp.le.s32.totalorder %v49, 14
  %vm62 = vcmp.le.s32.totalorder %v50, 14
  %vm63 = vcmp.le.s32.totalorder %v51, 14
  %vm64 = vcmp.ge.s32.totalorder %v52, 1
  %vm65 = vcmp.ge.s32.totalorder %v53, 1
  %vm66 = vcmp.ge.s32.totalorder %v54, 1
  %vm67 = vcmp.ge.s32.totalorder %v55, 1
  %vm68 = vcmp.le.s32.totalorder %v52, 14
  %vm69 = vcmp.le.s32.totalorder %v53, 14
  %vm70 = vcmp.le.s32.totalorder %v54, 14
  %vm71 = vcmp.le.s32.totalorder %v55, 14
  %v72 = vld [vmem:[%s0] sm:$0xff]
  %v73 = vld [vmem:[%s0 + $0x8] sm:$0xff]
  %v76 = vcombine.high %v72, %v72
  %v77 = vcombine.high %v73, %v73
  %80 = vrot.lane.b32.xlu0 %v72, 17
  %v81 = vpop.permute.xlu0 %80
  %82 = vrot.lane.b32.xlu0 %v76, 17
  %v83 = vpop.permute.xlu0 %82
  %84 = vrot.lane.b32.xlu0 %v73, 17
  %v85 = vpop.permute.xlu0 %84
  %86 = vrot.lane.b32.xlu0 %v77, 17
  %v87 = vpop.permute.xlu0 %86
  %vm88 = vcmp.lt.s32.totalorder %v40, 17
  %v89 = vsel %vm88, %v85, %v87
  %v90 = vsel %vm88, %v83, %v85
  %v91 = vsel %vm88, %v81, %v83
  %v92 = vsel %vm88, %v87, %v81
  %vm93 = vmand %vm56, %vm64
  %vm94 = vmand %vm57, %vm65
  %vm95 = vmand %vm58, %vm66
  %vm96 = vmand %vm59, %vm67
  %v97 = vsel %vm93, 1, 0
  %v98 = vsel %vm94, 1, 0
  %v99 = vsel %vm95, 1, 0
  %v100 = vsel %vm96, 1, 0
  %vm101 = vcmp.eq.s32.totalorder %v97, 1
  %vm102 = vcmp.eq.s32.totalorder %v98, 1
  %vm103 = vcmp.eq.s32.totalorder %v99, 1
  %vm104 = vcmp.eq.s32.totalorder %v100, 1
  %v105 = vsel %vm101, %v92, 0.0
  %v106 = vsel %vm102, %v91, 0.0
  %v107 = vsel %vm103, %v90, 0.0
  %v108 = vsel %vm104, %v89, 0.0
  %109 = vrot.lane.b32.xlu0 %v72, 16
  %v110 = vpop.permute.xlu0 %109
  %111 = vrot.lane.b32.xlu0 %v76, 16
  %v112 = vpop.permute.xlu0 %111
  %113 = vrot.lane.b32.xlu0 %v73, 16
  %v114 = vpop.permute.xlu0 %113
  %115 = vrot.lane.b32.xlu0 %v77, 16
  %v116 = vpop.permute.xlu0 %115
  %vm117 = vcmp.lt.s32.totalorder %v40, 16
  %v118 = vsel %vm117, %v114, %v116
  %v119 = vsel %vm117, %v112, %v114
  %v120 = vsel %vm117, %v110, %v112
  %v121 = vsel %vm117, %v116, %v110
  %v122 = vsel %vm56, 1, 0
  %v123 = vsel %vm57, 1, 0
  %v124 = vsel %vm58, 1, 0
  %v125 = vsel %vm59, 1, 0
  %vm126 = vcmp.eq.s32.totalorder %v122, 1
  %vm127 = vcmp.eq.s32.totalorder %v123, 1
  %vm128 = vcmp.eq.s32.totalorder %v124, 1
  %vm129 = vcmp.eq.s32.totalorder %v125, 1
  %v130 = vsel %vm126, %v121, 0.0
  %v131 = vsel %vm127, %v120, 0.0
  %v132 = vsel %vm128, %v119, 0.0
  %v133 = vsel %vm129, %v118, 0.0
  %134 = vrot.lane.b32.xlu0 %v72, 15
  %v135 = vpop.permute.xlu0 %134
  %136 = vrot.lane.b32.xlu0 %v76, 15
  %v137 = vpop.permute.xlu0 %136
  %138 = vrot.lane.b32.xlu0 %v73, 15
  %v139 = vpop.permute.xlu0 %138
  %140 = vrot.lane.b32.xlu0 %v77, 15
  %v141 = vpop.permute.xlu0 %140
  %vm142 = vcmp.lt.s32.totalorder %v40, 15
  %v143 = vsel %vm142, %v139, %v141
  %v144 = vsel %vm142, %v137, %v139
  %v145 = vsel %vm142, %v135, %v137
  %v146 = vsel %vm142, %v141, %v135
  %vm147 = vmand %vm56, %vm68
  %vm148 = vmand %vm57, %vm69
  %vm149 = vmand %vm58, %vm70
  %vm150 = vmand %vm59, %vm71
  %v151 = vsel %vm147, 1, 0
  %v152 = vsel %vm148, 1, 0
  %v153 = vsel %vm149, 1, 0
  %v154 = vsel %vm150, 1, 0
  %vm155 = vcmp.eq.s32.totalorder %v151, 1
  %vm156 = vcmp.eq.s32.totalorder %v152, 1
  %vm157 = vcmp.eq.s32.totalorder %v153, 1
  %vm158 = vcmp.eq.s32.totalorder %v154, 1
  %v159 = vsel %vm155, %v146, 0.0
  %v160 = vsel %vm156, %v145, 0.0
  %v161 = vsel %vm157, %v144, 0.0
  %v162 = vsel %vm158, %v143, 0.0
  %163 = vrot.lane.b32.xlu0 %v72, 1
  %v164 = vpop.permute.xlu0 %163
  %165 = vrot.lane.b32.xlu0 %v76, 1
  %v166 = vpop.permute.xlu0 %165
  %167 = vrot.lane.b32.xlu0 %v73, 1
  %v168 = vpop.permute.xlu0 %167
  %169 = vrot.lane.b32.xlu0 %v77, 1
  %v170 = vpop.permute.xlu0 %169
  %vm171 = vcmp.lt.s32.totalorder %v40, 1
  %v172 = vsel %vm171, %v168, %v170
  %v173 = vsel %vm171, %v166, %v168
  %v174 = vsel %vm171, %v164, %v166
  %v175 = vsel %vm171, %v170, %v164
  %v176 = vsel %vm64, 1, 0
  %v177 = vsel %vm65, 1, 0
  %v178 = vsel %vm66, 1, 0
  %v179 = vsel %vm67, 1, 0
  %vm180 = vcmp.eq.s32.totalorder %v176, 1
  %vm181 = vcmp.eq.s32.totalorder %v177, 1
  %vm182 = vcmp.eq.s32.totalorder %v178, 1
  %vm183 = vcmp.eq.s32.totalorder %v179, 1
  %v184 = vsel %vm180, %v175, 0.0
  %v185 = vsel %vm181, %v174, 0.0
  %v186 = vsel %vm182, %v173, 0.0
  %v187 = vsel %vm183, %v172, 0.0
  %188 = vrot.lane.b32.xlu0 %v72, 127
  %v189 = vpop.permute.xlu0 %188
  %190 = vrot.lane.b32.xlu0 %v76, 127
  %v191 = vpop.permute.xlu0 %190
  %192 = vrot.lane.b32.xlu0 %v73, 127
  %v193 = vpop.permute.xlu0 %192
  %194 = vrot.lane.b32.xlu0 %v77, 127
  %v195 = vpop.permute.xlu0 %194
  %vm196 = vcmp.lt.s32.totalorder %v40, 127
  %v197 = vsel %vm196, %v193, %v195
  %v198 = vsel %vm196, %v191, %v193
  %v199 = vsel %vm196, %v189, %v191
  %v200 = vsel %vm196, %v195, %v189
  %v201 = vsel %vm68, 1, 0
  %v202 = vsel %vm69, 1, 0
  %v203 = vsel %vm70, 1, 0
  %v204 = vsel %vm71, 1, 0
  %vm205 = vcmp.eq.s32.totalorder %v201, 1
  %vm206 = vcmp.eq.s32.totalorder %v202, 1
  %vm207 = vcmp.eq.s32.totalorder %v203, 1
  %vm208 = vcmp.eq.s32.totalorder %v204, 1
  %v209 = vsel %vm205, %v199, 0.0
  %v210 = vsel %vm206, %v198, 0.0
  %v211 = vsel %vm207, %v197, 0.0
  %v212 = vsel %vm208, %v200, 0.0
  %213 = vrot.lane.b32.xlu0 %v72, 113
  %v214 = vpop.permute.xlu0 %213
  %215 = vrot.lane.b32.xlu0 %v76, 113
  %v216 = vpop.permute.xlu0 %215
  %217 = vrot.lane.b32.xlu0 %v73, 113
  %v218 = vpop.permute.xlu0 %217
  %219 = vrot.lane.b32.xlu0 %v77, 113
  %v220 = vpop.permute.xlu0 %219
  %vm221 = vcmp.lt.s32.totalorder %v40, 113
  %v222 = vsel %vm221, %v218, %v220
  %v223 = vsel %vm221, %v216, %v218
  %v224 = vsel %vm221, %v214, %v216
  %v225 = vsel %vm221, %v220, %v214
  %vm226 = vmand %vm60, %vm64
  %vm227 = vmand %vm61, %vm65
  %vm228 = vmand %vm62, %vm66
  %vm229 = vmand %vm63, %vm67
  %v230 = vsel %vm226, 1, 0
  %v231 = vsel %vm227, 1, 0
  %v232 = vsel %vm228, 1, 0
  %v233 = vsel %vm229, 1, 0
  %vm234 = vcmp.eq.s32.totalorder %v230, 1
  %vm235 = vcmp.eq.s32.totalorder %v231, 1
  %vm236 = vcmp.eq.s32.totalorder %v232, 1
  %vm237 = vcmp.eq.s32.totalorder %v233, 1
  %v238 = vsel %vm234, %v224, 0.0
  %v239 = vsel %vm235, %v223, 0.0
  %v240 = vsel %vm236, %v222, 0.0
  %v241 = vsel %vm237, %v225, 0.0
  %242 = vrot.lane.b32.xlu0 %v72, 112
  %v243 = vpop.permute.xlu0 %242
  %244 = vrot.lane.b32.xlu0 %v76, 112
  %v245 = vpop.permute.xlu0 %244
  %246 = vrot.lane.b32.xlu0 %v73, 112
  %v247 = vpop.permute.xlu0 %246
  %248 = vrot.lane.b32.xlu0 %v77, 112
  %v249 = vpop.permute.xlu0 %248
  %vm250 = vcmp.lt.s32.totalorder %v40, 112
  %v251 = vsel %vm250, %v247, %v249
  %v252 = vsel %vm250, %v245, %v247
  %v253 = vsel %vm250, %v243, %v245
  %v254 = vsel %vm250, %v249, %v243
  %v255 = vsel %vm60, 1, 0
  %v256 = vsel %vm61, 1, 0
  %v257 = vsel %vm62, 1, 0
  %v258 = vsel %vm63, 1, 0
  %vm259 = vcmp.eq.s32.totalorder %v255, 1
  %vm260 = vcmp.eq.s32.totalorder %v256, 1
  %vm261 = vcmp.eq.s32.totalorder %v257, 1
  %vm262 = vcmp.eq.s32.totalorder %v258, 1
  %v263 = vsel %vm259, %v253, 0.0
  %v264 = vsel %vm260, %v252, 0.0
  %v265 = vsel %vm261, %v251, 0.0
  %v266 = vsel %vm262, %v254, 0.0
  %267 = vrot.lane.b32.xlu0 %v72, 111
  %v268 = vpop.permute.xlu0 %267
  %269 = vrot.lane.b32.xlu0 %v76, 111
  %v270 = vpop.permute.xlu0 %269
  %271 = vrot.lane.b32.xlu0 %v73, 111
  %v272 = vpop.permute.xlu0 %271
  %273 = vrot.lane.b32.xlu0 %v77, 111
  %v274 = vpop.permute.xlu0 %273
  %vm275 = vcmp.lt.s32.totalorder %v40, 111
  %v276 = vsel %vm275, %v272, %v274
  %v277 = vsel %vm275, %v270, %v272
  %v278 = vsel %vm275, %v268, %v270
  %v279 = vsel %vm275, %v274, %v268
  %vm280 = vmand %vm60, %vm68
  %vm281 = vmand %vm61, %vm69
  %vm282 = vmand %vm62, %vm70
  %vm283 = vmand %vm63, %vm71
  %v284 = vsel %vm280, 1, 0
  %v285 = vsel %vm281, 1, 0
  %v286 = vsel %vm282, 1, 0
  %v287 = vsel %vm283, 1, 0
  %vm288 = vcmp.eq.s32.totalorder %v284, 1
  %vm289 = vcmp.eq.s32.totalorder %v285, 1
  %vm290 = vcmp.eq.s32.totalorder %v286, 1
  %vm291 = vcmp.eq.s32.totalorder %v287, 1
  %v292 = vsel %vm288, %v278, 0.0
  %v293 = vsel %vm289, %v277, 0.0
  %v294 = vsel %vm290, %v276, 0.0
  %v295 = vsel %vm291, %v279, 0.0
  %v300 = vrot.slane %v130, 4
  %v301 = vrot.slane %v131, 4
  %v302 = vrot.slane %v132, 4
  %v303 = vrot.slane %v133, 4
  %v312 = vrot.slane %v184, 4
  %v313 = vrot.slane %v185, 4
  %v314 = vrot.slane %v186, 4
  %v315 = vrot.slane %v187, 4
  %v324 = vrot.slane %v209, 4
  %v325 = vrot.slane %v210, 4
  %v326 = vrot.slane %v211, 4
  %v327 = vrot.slane %v212, 4
  %v336 = vrot.slane %v263, 4
  %v337 = vrot.slane %v264, 4
  %v338 = vrot.slane %v265, 4
  %v339 = vrot.slane %v266, 4
  %vm344 = vcmask 1043456
  %v345 = vsel %vm344, %v105, %v300
  %v346 = vsel %vm344, %v106, %v301
  %v347 = vsel %vm344, %v107, %v302
  %v348 = vsel %vm344, %v108, %v303
  %v349 = vsel %vm344, %v159, %v312
  %v350 = vsel %vm344, %v160, %v313
  %v351 = vsel %vm344, %v161, %v314
  %v352 = vsel %vm344, %v162, %v315
  %v353 = vsel %vm344, %v72, %v324
  %v354 = vsel %vm344, %v76, %v325
  %v355 = vsel %vm344, %v73, %v326
  %v356 = vsel %vm344, %v77, %v327
  %v357 = vsel %vm344, %v238, %v336
  %v358 = vsel %vm344, %v239, %v337
  %v359 = vsel %vm344, %v240, %v338
  %v360 = vsel %vm344, %v241, %v339
  %v361 = vpack.c.bf16 %v349, %v345
  %v362 = vpack.c.bf16 %v350, %v346
  %v363 = vpack.c.bf16 %v351, %v347
  %v364 = vpack.c.bf16 %v352, %v348
  %v365 = vpack.c.bf16 %v357, %v353
  %v366 = vpack.c.bf16 %v358, %v354
  %v367 = vpack.c.bf16 %v359, %v355
  %v368 = vpack.c.bf16 %v360, %v356
  %v369 = vpack.c.bf16 %v292, %v292
  %v370 = vpack.c.bf16 %v293, %v293
  %v371 = vpack.c.bf16 %v294, %v294
  %v372 = vpack.c.bf16 %v295, %v295
  %v373 = vld [vmem:[%s1] sm:$0xf]
  %v374 = vld [vmem:[%s2] sm:$0xff]
  %376 = vset.pattern.permute.xlu0 0
  %377 = vperm.xlu0 %376, %v374
  %v378 = vpop.permute.xlu0 %377
  %vm380 = vcmask 293888
  %v382 = vsel %vm380, %v373, 0
  %vm384 = vcmask 1041408
  %v386 = vsel %vm384, %v369, 0
  %v389 = vsel %vm384, %v370, 0
  %v392 = vsel %vm384, %v371, 0
  %v395 = vsel %vm384, %v372, 0
  %397 = vmatprep.subr.bf16.mxu0 %v362
  %398 = vmatpush1.bf16.msra.mxu0 %v361
  %399 = vmatprep.subr.bf16.mxu0 %v366
  %400 = vmatpush1.bf16.msra.mxu0 %v365
  %401 = vmatprep.subr.bf16.mxu0 %v389
  %402 = vmatpush1.bf16.msra.mxu0 %v386
  %403 = vmatprep.subr.bf16.mxu0 0
  %404 = vmatpush1.bf16.msra.mxu0 0
  %405 = vmatprep.subr.bf16.mxu0 0
  %406 = vmatpush1.bf16.msra.mxu0 0
  %407 = vmatprep.subr.bf16.mxu0 0
  %408 = vmatpush1.bf16.msra.mxu0 0
  %409 = vmatprep.subr.bf16.mxu0 0
  %410 = vmatpush1.bf16.msra.mxu0 0
  %411 = vmatprep.subr.bf16.mxu0 0
  %412 = vmatpush1.bf16.msra.mxu0 0
  %413 = vmatprep.subr.bf16.mxu0 0
  %414 = vmatpush1.bf16.msra.mxu0 0
  %415 = vmatprep.subr.bf16.mxu0 0
  %416 = vmatpush1.bf16.msra.mxu0 0
  %417 = vmatprep.subr.bf16.mxu0 0
  %418 = vmatpush1.bf16.msra.mxu0 0
  %419 = vmatprep.subr.bf16.mxu0 0
  %420 = vmatpush1.bf16.msra.mxu0 0
  %421 = vmatprep.subr.bf16.mxu0 0
  %422 = vmatpush1.bf16.msra.mxu0 0
  %423 = vmatprep.subr.bf16.mxu0 0
  %424 = vmatpush1.bf16.msra.mxu0 0
  %425 = vmatprep.subr.bf16.mxu0 0
  %426 = vmatpush1.bf16.msra.mxu0 0
  %427 = vmatprep.subr.bf16.mxu0 0
  %428 = vmatpush1.bf16.msra.mxu0 0
  %429 = vmatprep.mubr.bf16.mxu0 0
  %430 = vmatmul.mubr.bf16.gmra.mrb[0].mxu0 %v382
  %v431 = vpop.f32.mrb[0].mxu0
  %v432 = vadd.f32 %v378, %v431
  %v433 = vpop.f32.mrb[0].mxu0
  %v434 = vadd.f32 %v378, %v433
  %v435 = vpop.f32.mrb[0].mxu0
  %v436 = vpop.f32.mrb[0].mxu0
  %437 = vdwg.mxu0
  %438 = vmatprep.subr.bf16.mxu0 %v364
  %439 = vmatpush1.bf16.msra.mxu0 %v363
  %440 = vmatprep.subr.bf16.mxu0 %v368
  %441 = vmatpush1.bf16.msra.mxu0 %v367
  %442 = vmatprep.subr.bf16.mxu0 %v395
  %443 = vmatpush1.bf16.msra.mxu0 %v392
  %444 = vmatprep.subr.bf16.mxu0 0
  %445 = vmatpush1.bf16.msra.mxu0 0
  %446 = vmatprep.subr.bf16.mxu0 0
  %447 = vmatpush1.bf16.msra.mxu0 0
  %448 = vmatprep.subr.bf16.mxu0 0
  %449 = vmatpush1.bf16.msra.mxu0 0
  %450 = vmatprep.subr.bf16.mxu0 0
  %451 = vmatpush1.bf16.msra.mxu0 0
  %452 = vmatprep.subr.bf16.mxu0 0
  %453 = vmatpush1.bf16.msra.mxu0 0
  %454 = vmatprep.subr.bf16.mxu0 0
  %455 = vmatpush1.bf16.msra.mxu0 0
  %456 = vmatprep.subr.bf16.mxu0 0
  %457 = vmatpush1.bf16.msra.mxu0 0
  %458 = vmatprep.subr.bf16.mxu0 0
  %459 = vmatpush1.bf16.msra.mxu0 0
  %460 = vmatprep.subr.bf16.mxu0 0
  %461 = vmatpush1.bf16.msra.mxu0 0
  %462 = vmatprep.subr.bf16.mxu0 0
  %463 = vmatpush1.bf16.msra.mxu0 0
  %464 = vmatprep.subr.bf16.mxu0 0
  %465 = vmatpush1.bf16.msra.mxu0 0
  %466 = vmatprep.subr.bf16.mxu0 0
  %467 = vmatpush1.bf16.msra.mxu0 0
  %468 = vmatprep.subr.bf16.mxu0 0
  %469 = vmatpush1.bf16.msra.mxu0 0
  %470 = vmatprep.mubr.bf16.mxu0 0
  %471 = vmatmul.mubr.bf16.gmra.mrb[0].mxu0 %v382
  %v472 = vpop.f32.mrb[0].mxu0
  %v473 = vadd.f32 %v378, %v472
  %v474 = vpop.f32.mrb[0].mxu0
  %v475 = vadd.f32 %v378, %v474
  %v476 = vpop.f32.mrb[0].mxu0
  %v477 = vpop.f32.mrb[0].mxu0
  %478 = vdwg.mxu0
  %v479 = vmul.f32 %v432, 0.1
  %v480 = vmul.f32 %v434, 0.1
  %v481 = vmul.f32 %v473, 0.1
  %v482 = vmul.f32 %v475, 0.1
  %v483 = vmax.f32 %v432, %v479
  %v484 = vmax.f32 %v434, %v480
  %v485 = vmax.f32 %v473, %v481
  %v486 = vmax.f32 %v475, %v482
  %487 = vrot.lane.b32.xlu0 %v483, 17
  %v488 = vpop.permute.xlu0 %487
  %489 = vrot.lane.b32.xlu0 %v484, 17
  %v490 = vpop.permute.xlu0 %489
  %491 = vrot.lane.b32.xlu0 %v485, 17
  %v492 = vpop.permute.xlu0 %491
  %493 = vrot.lane.b32.xlu0 %v486, 17
  %v494 = vpop.permute.xlu0 %493
  %v495 = vsel %vm88, %v492, %v494
  %v496 = vsel %vm88, %v490, %v492
  %v497 = vsel %vm88, %v488, %v490
  %v498 = vsel %vm88, %v494, %v488
  %v499 = vsel %vm101, %v498, 0.0
  %v500 = vsel %vm102, %v497, 0.0
  %v501 = vsel %vm103, %v496, 0.0
  %v502 = vsel %vm104, %v495, 0.0
  %503 = vrot.lane.b32.xlu0 %v483, 16
  %v504 = vpop.permute.xlu0 %503
  %505 = vrot.lane.b32.xlu0 %v484, 16
  %v506 = vpop.permute.xlu0 %505
  %507 = vrot.lane.b32.xlu0 %v485, 16
  %v508 = vpop.permute.xlu0 %507
  %509 = vrot.lane.b32.xlu0 %v486, 16
  %v510 = vpop.permute.xlu0 %509
  %v511 = vsel %vm117, %v508, %v510
  %v512 = vsel %vm117, %v506, %v508
  %v513 = vsel %vm117, %v504, %v506
  %v514 = vsel %vm117, %v510, %v504
  %v515 = vsel %vm126, %v514, 0.0
  %v516 = vsel %vm127, %v513, 0.0
  %v517 = vsel %vm128, %v512, 0.0
  %v518 = vsel %vm129, %v511, 0.0
  %519 = vrot.lane.b32.xlu0 %v483, 15
  %v520 = vpop.permute.xlu0 %519
  %521 = vrot.lane.b32.xlu0 %v484, 15
  %v522 = vpop.permute.xlu0 %521
  %523 = vrot.lane.b32.xlu0 %v485, 15
  %v524 = vpop.permute.xlu0 %523
  %525 = vrot.lane.b32.xlu0 %v486, 15
  %v526 = vpop.permute.xlu0 %525
  %v527 = vsel %vm142, %v524, %v526
  %v528 = vsel %vm142, %v522, %v524
  %v529 = vsel %vm142, %v520, %v522
  %v530 = vsel %vm142, %v526, %v520
  %v531 = vsel %vm155, %v530, 0.0
  %v532 = vsel %vm156, %v529, 0.0
  %v533 = vsel %vm157, %v528, 0.0
  %v534 = vsel %vm158, %v527, 0.0
  %535 = vrot.lane.b32.xlu0 %v483, 1
  %v536 = vpop.permute.xlu0 %535
  %537 = vrot.lane.b32.xlu0 %v484, 1
  %v538 = vpop.permute.xlu0 %537
  %539 = vrot.lane.b32.xlu0 %v485, 1
  %v540 = vpop.permute.xlu0 %539
  %541 = vrot.lane.b32.xlu0 %v486, 1
  %v542 = vpop.permute.xlu0 %541
  %v543 = vsel %vm171, %v540, %v542
  %v544 = vsel %vm171, %v538, %v540
  %v545 = vsel %vm171, %v536, %v538
  %v546 = vsel %vm171, %v542, %v536
  %v547 = vsel %vm180, %v546, 0.0
  %v548 = vsel %vm181, %v545, 0.0
  %v549 = vsel %vm182, %v544, 0.0
  %v550 = vsel %vm183, %v543, 0.0
  %551 = vrot.lane.b32.xlu0 %v483, 127
  %v552 = vpop.permute.xlu0 %551
  %553 = vrot.lane.b32.xlu0 %v484, 127
  %v554 = vpop.permute.xlu0 %553
  %555 = vrot.lane.b32.xlu0 %v485, 127
  %v556 = vpop.permute.xlu0 %555
  %557 = vrot.lane.b32.xlu0 %v486, 127
  %v558 = vpop.permute.xlu0 %557
  %v559 = vsel %vm196, %v556, %v558
  %v560 = vsel %vm196, %v554, %v556
  %v561 = vsel %vm196, %v552, %v554
  %v562 = vsel %vm196, %v558, %v552
  %v563 = vsel %vm205, %v561, 0.0
  %v564 = vsel %vm206, %v560, 0.0
  %v565 = vsel %vm207, %v559, 0.0
  %v566 = vsel %vm208, %v562, 0.0
  %567 = vrot.lane.b32.xlu0 %v483, 113
  %v568 = vpop.permute.xlu0 %567
  %569 = vrot.lane.b32.xlu0 %v484, 113
  %v570 = vpop.permute.xlu0 %569
  %571 = vrot.lane.b32.xlu0 %v485, 113
  %v572 = vpop.permute.xlu0 %571
  %573 = vrot.lane.b32.xlu0 %v486, 113
  %v574 = vpop.permute.xlu0 %573
  %v575 = vsel %vm221, %v572, %v574
  %v576 = vsel %vm221, %v570, %v572
  %v577 = vsel %vm221, %v568, %v570
  %v578 = vsel %vm221, %v574, %v568
  %v579 = vsel %vm234, %v577, 0.0
  %v580 = vsel %vm235, %v576, 0.0
  %v581 = vsel %vm236, %v575, 0.0
  %v582 = vsel %vm237, %v578, 0.0
  %583 = vrot.lane.b32.xlu0 %v483, 112
  %v584 = vpop.permute.xlu0 %583
  %585 = vrot.lane.b32.xlu0 %v484, 112
  %v586 = vpop.permute.xlu0 %585
  %587 = vrot.lane.b32.xlu0 %v485, 112
  %v588 = vpop.permute.xlu0 %587
  %589 = vrot.lane.b32.xlu0 %v486, 112
  %v590 = vpop.permute.xlu0 %589
  %v591 = vsel %vm250, %v588, %v590
  %v592 = vsel %vm250, %v586, %v588
  %v593 = vsel %vm250, %v584, %v586
  %v594 = vsel %vm250, %v590, %v584
  %v595 = vsel %vm259, %v593, 0.0
  %v596 = vsel %vm260, %v592, 0.0
  %v597 = vsel %vm261, %v591, 0.0
  %v598 = vsel %vm262, %v594, 0.0
  %599 = vrot.lane.b32.xlu0 %v483, 111
  %v600 = vpop.permute.xlu0 %599
  %601 = vrot.lane.b32.xlu0 %v484, 111
  %v602 = vpop.permute.xlu0 %601
  %603 = vrot.lane.b32.xlu0 %v485, 111
  %v604 = vpop.permute.xlu0 %603
  %605 = vrot.lane.b32.xlu0 %v486, 111
  %v606 = vpop.permute.xlu0 %605
  %v607 = vsel %vm275, %v604, %v606
  %v608 = vsel %vm275, %v602, %v604
  %v609 = vsel %vm275, %v600, %v602
  %v610 = vsel %vm275, %v606, %v600
  %v611 = vsel %vm288, %v609, 0.0
  %v612 = vsel %vm289, %v608, 0.0
  %v613 = vsel %vm290, %v607, 0.0
  %v614 = vsel %vm291, %v610, 0.0
  %v615 = vpack.c.bf16 %v515, %v499
  %v616 = vpack.c.bf16 %v516, %v500
  %v617 = vpack.c.bf16 %v517, %v501
  %v618 = vpack.c.bf16 %v518, %v502
  %v619 = vpack.c.bf16 %v547, %v531
  %v620 = vpack.c.bf16 %v548, %v532
  %v621 = vpack.c.bf16 %v549, %v533
  %v622 = vpack.c.bf16 %v550, %v534
  %v623 = vpack.c.bf16 %v563, %v483
  %v624 = vpack.c.bf16 %v564, %v484
  %v625 = vpack.c.bf16 %v565, %v485
  %v626 = vpack.c.bf16 %v566, %v486
  %v627 = vpack.c.bf16 %v595, %v579
  %v628 = vpack.c.bf16 %v596, %v580
  %v629 = vpack.c.bf16 %v597, %v581
  %v630 = vpack.c.bf16 %v598, %v582
  %v631 = vpack.c.bf16 %v611, %v611
  %v632 = vpack.c.bf16 %v612, %v612
  %v633 = vpack.c.bf16 %v613, %v613
  %v634 = vpack.c.bf16 %v614, %v614
  %v635 = vld [vmem:[%s3] sm:$0xf]
  %v636 = vld [vmem:[%s3 + $0x4] sm:$0xf]
  %v637 = vld [vmem:[%s4] sm:$0xff]
  %v638 = vld [vmem:[%s4 + $0x8] sm:$0xff]
  %640 = vset.pattern.permute.xlu0 0
  %641 = vperm.xlu0 %640, %v637
  %v642 = vpop.permute.xlu0 %641
  %645 = vset.pattern.permute.xlu0 0
  %646 = vperm.xlu0 %645, %v638
  %v647 = vpop.permute.xlu0 %646
  %v651 = vunpack.c.l.b16 %v635
  %v652 = vunpack.c.l.b16 %v636
  %v653 = vpack.c.b16 %v652, %v651
  %vm654 = vcmask 588800
  %v656 = vsel %vm654, %v653, 0
  %v659 = vsel %vm344, %v631, 0
  %v662 = vsel %vm344, %v632, 0
  %v665 = vsel %vm344, %v633, 0
  %v668 = vsel %vm344, %v634, 0
  %670 = vmatprep.subr.bf16.mxu0 %v616
  %671 = vmatpush1.bf16.msra.mxu0 %v615
  %672 = vmatprep.subr.bf16.mxu0 %v620
  %673 = vmatpush1.bf16.msra.mxu0 %v619
  %674 = vmatprep.subr.bf16.mxu0 %v624
  %675 = vmatpush1.bf16.msra.mxu0 %v623
  %676 = vmatprep.subr.bf16.mxu0 %v628
  %677 = vmatpush1.bf16.msra.mxu0 %v627
  %678 = vmatprep.subr.bf16.mxu0 %v662
  %679 = vmatpush1.bf16.msra.mxu0 %v659
  %680 = vmatprep.subr.bf16.mxu0 0
  %681 = vmatpush1.bf16.msra.mxu0 0
  %682 = vmatprep.subr.bf16.mxu0 0
  %683 = vmatpush1.bf16.msra.mxu0 0
  %684 = vmatprep.subr.bf16.mxu0 0
  %685 = vmatpush1.bf16.msra.mxu0 0
  %686 = vmatprep.subr.bf16.mxu0 0
  %687 = vmatpush1.bf16.msra.mxu0 0
  %688 = vmatprep.subr.bf16.mxu0 0
  %689 = vmatpush1.bf16.msra.mxu0 0
  %690 = vmatprep.subr.bf16.mxu0 0
  %691 = vmatpush1.bf16.msra.mxu0 0
  %692 = vmatprep.subr.bf16.mxu0 0
  %693 = vmatpush1.bf16.msra.mxu0 0
  %694 = vmatprep.subr.bf16.mxu0 0
  %695 = vmatpush1.bf16.msra.mxu0 0
  %696 = vmatprep.subr.bf16.mxu0 0
  %697 = vmatpush1.bf16.msra.mxu0 0
  %698 = vmatprep.subr.bf16.mxu0 0
  %699 = vmatpush1.bf16.msra.mxu0 0
  %700 = vmatprep.subr.bf16.mxu0 0
  %701 = vmatpush1.bf16.msra.mxu0 0
  %702 = vmatprep.mubr.bf16.mxu0 0
  %703 = vmatmul.mubr.bf16.gmra.mrb[0].mxu0 %v656
  %v704 = vpop.f32.mrb[0].mxu0
  %v705 = vadd.f32 %v642, %v704
  %v706 = vpop.f32.mrb[0].mxu0
  %v707 = vadd.f32 %v642, %v706
  %v708 = vpop.f32.mrb[0].mxu0
  %v709 = vadd.f32 %v647, %v708
  %v710 = vpop.f32.mrb[0].mxu0
  %v711 = vadd.f32 %v647, %v710
  %712 = vdwg.mxu0
  %713 = vmatprep.subr.bf16.mxu0 %v618
  %714 = vmatpush1.bf16.msra.mxu0 %v617
  %715 = vmatprep.subr.bf16.mxu0 %v622
  %716 = vmatpush1.bf16.msra.mxu0 %v621
  %717 = vmatprep.subr.bf16.mxu0 %v626
  %718 = vmatpush1.bf16.msra.mxu0 %v625
  %719 = vmatprep.subr.bf16.mxu0 %v630
  %720 = vmatpush1.bf16.msra.mxu0 %v629
  %721 = vmatprep.subr.bf16.mxu0 %v668
  %722 = vmatpush1.bf16.msra.mxu0 %v665
  %723 = vmatprep.subr.bf16.mxu0 0
  %724 = vmatpush1.bf16.msra.mxu0 0
  %725 = vmatprep.subr.bf16.mxu0 0
  %726 = vmatpush1.bf16.msra.mxu0 0
  %727 = vmatprep.subr.bf16.mxu0 0
  %728 = vmatpush1.bf16.msra.mxu0 0
  %729 = vmatprep.subr.bf16.mxu0 0
  %730 = vmatpush1.bf16.msra.mxu0 0
  %731 = vmatprep.subr.bf16.mxu0 0
  %732 = vmatpush1.bf16.msra.mxu0 0
  %733 = vmatprep.subr.bf16.mxu0 0
  %734 = vmatpush1.bf16.msra.mxu0 0
  %735 = vmatprep.subr.bf16.mxu0 0
  %736 = vmatpush1.bf16.msra.mxu0 0
  %737 = vmatprep.subr.bf16.mxu0 0
  %738 = vmatpush1.bf16.msra.mxu0 0
  %739 = vmatprep.subr.bf16.mxu0 0
  %740 = vmatpush1.bf16.msra.mxu0 0
  %741 = vmatprep.subr.bf16.mxu0 0
  %742 = vmatpush1.bf16.msra.mxu0 0
  %743 = vmatprep.subr.bf16.mxu0 0
  %744 = vmatpush1.bf16.msra.mxu0 0
  %745 = vmatprep.mubr.bf16.mxu0 0
  %746 = vmatmul.mubr.bf16.gmra.mrb[0].mxu0 %v656
  %v747 = vpop.f32.mrb[0].mxu0
  %v748 = vadd.f32 %v642, %v747
  %v749 = vpop.f32.mrb[0].mxu0
  %v750 = vadd.f32 %v642, %v749
  %v751 = vpop.f32.mrb[0].mxu0
  %v752 = vadd.f32 %v647, %v751
  %v753 = vpop.f32.mrb[0].mxu0
  %v754 = vadd.f32 %v647, %v753
  %755 = vdwg.mxu0
  %v756 = vmul.f32 %v705, 0.1
  %v757 = vmul.f32 %v707, 0.1
  %v758 = vmul.f32 %v748, 0.1
  %v759 = vmul.f32 %v750, 0.1
  %v760 = vmul.f32 %v709, 0.1
  %v761 = vmul.f32 %v711, 0.1
  %v762 = vmul.f32 %v752, 0.1
  %v763 = vmul.f32 %v754, 0.1
  %v764 = vmax.f32 %v705, %v756
  %v765 = vmax.f32 %v707, %v757
  %v766 = vmax.f32 %v748, %v758
  %v767 = vmax.f32 %v750, %v759
  %v768 = vmax.f32 %v709, %v760
  %v769 = vmax.f32 %v711, %v761
  %v770 = vmax.f32 %v752, %v762
  %v771 = vmax.f32 %v754, %v763
  %v772 = vld [vmem:[%s5] sm:$0xf]
  %v773 = vpack.c.bf16 %v768, %v764
  %v774 = vpack.c.bf16 %v769, %v765
  %v775 = vpack.c.bf16 %v770, %v766
  %v776 = vpack.c.bf16 %v771, %v767
  %v777 = vld [vmem:[%s6] sm:$0xff]
  %779 = vset.pattern.permute.xlu0 0
  %780 = vperm.xlu0 %779, %v777
  %v781 = vpop.permute.xlu0 %780
  %vm783 = vcmask 130048
  %v785 = vsel %vm783, %v772, 0
  %787 = vmatprep.subr.bf16.mxu0 %v774
  %788 = vmatpush1.bf16.msra.mxu0 %v773
  %789 = vmatprep.subr.bf16.mxu0 0
  %790 = vmatpush1.bf16.msra.mxu0 0
  %791 = vmatprep.subr.bf16.mxu0 0
  %792 = vmatpush1.bf16.msra.mxu0 0
  %793 = vmatprep.subr.bf16.mxu0 0
  %794 = vmatpush1.bf16.msra.mxu0 0
  %795 = vmatprep.subr.bf16.mxu0 0
  %796 = vmatpush1.bf16.msra.mxu0 0
  %797 = vmatprep.subr.bf16.mxu0 0
  %798 = vmatpush1.bf16.msra.mxu0 0
  %799 = vmatprep.subr.bf16.mxu0 0
  %800 = vmatpush1.bf16.msra.mxu0 0
  %801 = vmatprep.subr.bf16.mxu0 0
  %802 = vmatpush1.bf16.msra.mxu0 0
  %803 = vmatprep.subr.bf16.mxu0 0
  %804 = vmatpush1.bf16.msra.mxu0 0
  %805 = vmatprep.subr.bf16.mxu0 0
  %806 = vmatpush1.bf16.msra.mxu0 0
  %807 = vmatprep.subr.bf16.mxu0 0
  %808 = vmatpush1.bf16.msra.mxu0 0
  %809 = vmatprep.subr.bf16.mxu0 0
  %810 = vmatpush1.bf16.msra.mxu0 0
  %811 = vmatprep.subr.bf16.mxu0 0
  %812 = vmatpush1.bf16.msra.mxu0 0
  %813 = vmatprep.subr.bf16.mxu0 0
  %814 = vmatpush1.bf16.msra.mxu0 0
  %815 = vmatprep.subr.bf16.mxu0 0
  %816 = vmatpush1.bf16.msra.mxu0 0
  %817 = vmatprep.subr.bf16.mxu0 0
  %818 = vmatpush1.bf16.msra.mxu0 0
  %819 = vmatprep.mubr.bf16.mxu0 0
  %820 = vmatmul.mubr.bf16.gmra.mrb[0].mxu0 %v785
  %v821 = vpop.f32.mrb[0].mxu0
  %v822 = vadd.f32 %v781, %v821
  %v823 = vpop.f32.mrb[0].mxu0
  %v824 = vadd.f32 %v781, %v823
  %v825 = vpop.f32.mrb[0].mxu0
  %v826 = vpop.f32.mrb[0].mxu0
  %827 = vdwg.mxu0
  %828 = vmatprep.subr.bf16.mxu0 %v776
  %829 = vmatpush1.bf16.msra.mxu0 %v775
  %830 = vmatprep.subr.bf16.mxu0 0
  %831 = vmatpush1.bf16.msra.mxu0 0
  %832 = vmatprep.subr.bf16.mxu0 0
  %833 = vmatpush1.bf16.msra.mxu0 0
  %834 = vmatprep.subr.bf16.mxu0 0
  %835 = vmatpush1.bf16.msra.mxu0 0
  %836 = vmatprep.subr.bf16.mxu0 0
  %837 = vmatpush1.bf16.msra.mxu0 0
  %838 = vmatprep.subr.bf16.mxu0 0
  %839 = vmatpush1.bf16.msra.mxu0 0
  %840 = vmatprep.subr.bf16.mxu0 0
  %841 = vmatpush1.bf16.msra.mxu0 0
  %842 = vmatprep.subr.bf16.mxu0 0
  %843 = vmatpush1.bf16.msra.mxu0 0
  %844 = vmatprep.subr.bf16.mxu0 0
  %845 = vmatpush1.bf16.msra.mxu0 0
  %846 = vmatprep.subr.bf16.mxu0 0
  %847 = vmatpush1.bf16.msra.mxu0 0
  %848 = vmatprep.subr.bf16.mxu0 0
  %849 = vmatpush1.bf16.msra.mxu0 0
  %850 = vmatprep.subr.bf16.mxu0 0
  %851 = vmatpush1.bf16.msra.mxu0 0
  %852 = vmatprep.subr.bf16.mxu0 0
  %853 = vmatpush1.bf16.msra.mxu0 0
  %854 = vmatprep.subr.bf16.mxu0 0
  %855 = vmatpush1.bf16.msra.mxu0 0
  %856 = vmatprep.subr.bf16.mxu0 0
  %857 = vmatpush1.bf16.msra.mxu0 0
  %858 = vmatprep.subr.bf16.mxu0 0
  %859 = vmatpush1.bf16.msra.mxu0 0
  %860 = vmatprep.mubr.bf16.mxu0 0
  %861 = vmatmul.mubr.bf16.gmra.mrb[0].mxu0 %v785
  %v862 = vpop.f32.mrb[0].mxu0
  %v863 = vadd.f32 %v781, %v862
  %v864 = vpop.f32.mrb[0].mxu0
  %v865 = vadd.f32 %v781, %v864
  %v866 = vpop.f32.mrb[0].mxu0
  %v867 = vpop.f32.mrb[0].mxu0
  %868 = vdwg.mxu0
  %v869 = vmul.f32 %v822, 0.1
  %v870 = vmul.f32 %v824, 0.1
  %v871 = vmul.f32 %v863, 0.1
  %v872 = vmul.f32 %v865, 0.1
  %v873 = vmax.f32 %v822, %v869
  %v874 = vmax.f32 %v824, %v870
  %v875 = vmax.f32 %v863, %v871
  %v876 = vmax.f32 %v865, %v872
  %877 = vrot.lane.b32.xlu0 %v873, 17
  %v878 = vpop.permute.xlu0 %877
  %879 = vrot.lane.b32.xlu0 %v874, 17
  %v880 = vpop.permute.xlu0 %879
  %881 = vrot.lane.b32.xlu0 %v875, 17
  %v882 = vpop.permute.xlu0 %881
  %883 = vrot.lane.b32.xlu0 %v876, 17
  %v884 = vpop.permute.xlu0 %883
  %v885 = vsel %vm88, %v882, %v884
  %v886 = vsel %vm88, %v880, %v882
  %v887 = vsel %vm88, %v878, %v880
  %v888 = vsel %vm88, %v884, %v878
  %v889 = vsel %vm101, %v888, 0.0
  %v890 = vsel %vm102, %v887, 0.0
  %v891 = vsel %vm103, %v886, 0.0
  %v892 = vsel %vm104, %v885, 0.0
  %893 = vrot.lane.b32.xlu0 %v873, 16
  %v894 = vpop.permute.xlu0 %893
  %895 = vrot.lane.b32.xlu0 %v874, 16
  %v896 = vpop.permute.xlu0 %895
  %897 = vrot.lane.b32.xlu0 %v875, 16
  %v898 = vpop.permute.xlu0 %897
  %899 = vrot.lane.b32.xlu0 %v876, 16
  %v900 = vpop.permute.xlu0 %899
  %v901 = vsel %vm117, %v898, %v900
  %v902 = vsel %vm117, %v896, %v898
  %v903 = vsel %vm117, %v894, %v896
  %v904 = vsel %vm117, %v900, %v894
  %v905 = vsel %vm126, %v904, 0.0
  %v906 = vsel %vm127, %v903, 0.0
  %v907 = vsel %vm128, %v902, 0.0
  %v908 = vsel %vm129, %v901, 0.0
  %909 = vrot.lane.b32.xlu0 %v873, 15
  %v910 = vpop.permute.xlu0 %909
  %911 = vrot.lane.b32.xlu0 %v874, 15
  %v912 = vpop.permute.xlu0 %911
  %913 = vrot.lane.b32.xlu0 %v875, 15
  %v914 = vpop.permute.xlu0 %913
  %915 = vrot.lane.b32.xlu0 %v876, 15
  %v916 = vpop.permute.xlu0 %915
  %v917 = vsel %vm142, %v914, %v916
  %v918 = vsel %vm142, %v912, %v914
  %v919 = vsel %vm142, %v910, %v912
  %v920 = vsel %vm142, %v916, %v910
  %v921 = vsel %vm155, %v920, 0.0
  %v922 = vsel %vm156, %v919, 0.0
  %v923 = vsel %vm157, %v918, 0.0
  %v924 = vsel %vm158, %v917, 0.0
  %925 = vrot.lane.b32.xlu0 %v873, 1
  %v926 = vpop.permute.xlu0 %925
  %927 = vrot.lane.b32.xlu0 %v874, 1
  %v928 = vpop.permute.xlu0 %927
  %929 = vrot.lane.b32.xlu0 %v875, 1
  %v930 = vpop.permute.xlu0 %929
  %931 = vrot.lane.b32.xlu0 %v876, 1
  %v932 = vpop.permute.xlu0 %931
  %v933 = vsel %vm171, %v930, %v932
  %v934 = vsel %vm171, %v928, %v930
  %v935 = vsel %vm171, %v926, %v928
  %v936 = vsel %vm171, %v932, %v926
  %v937 = vsel %vm180, %v936, 0.0
  %v938 = vsel %vm181, %v935, 0.0
  %v939 = vsel %vm182, %v934, 0.0
  %v940 = vsel %vm183, %v933, 0.0
  %941 = vrot.lane.b32.xlu0 %v873, 127
  %v942 = vpop.permute.xlu0 %941
  %943 = vrot.lane.b32.xlu0 %v874, 127
  %v944 = vpop.permute.xlu0 %943
  %945 = vrot.lane.b32.xlu0 %v875, 127
  %v946 = vpop.permute.xlu0 %945
  %947 = vrot.lane.b32.xlu0 %v876, 127
  %v948 = vpop.permute.xlu0 %947
  %v949 = vsel %vm196, %v946, %v948
  %v950 = vsel %vm196, %v944, %v946
  %v951 = vsel %vm196, %v942, %v944
  %v952 = vsel %vm196, %v948, %v942
  %v953 = vsel %vm205, %v951, 0.0
  %v954 = vsel %vm206, %v950, 0.0
  %v955 = vsel %vm207, %v949, 0.0
  %v956 = vsel %vm208, %v952, 0.0
  %957 = vrot.lane.b32.xlu0 %v873, 113
  %v958 = vpop.permute.xlu0 %957
  %959 = vrot.lane.b32.xlu0 %v874, 113
  %v960 = vpop.permute.xlu0 %959
  %961 = vrot.lane.b32.xlu0 %v875, 113
  %v962 = vpop.permute.xlu0 %961
  %963 = vrot.lane.b32.xlu0 %v876, 113
  %v964 = vpop.permute.xlu0 %963
  %v965 = vsel %vm221, %v962, %v964
  %v966 = vsel %vm221, %v960, %v962
  %v967 = vsel %vm221, %v958, %v960
  %v968 = vsel %vm221, %v964, %v958
  %v969 = vsel %vm234, %v967, 0.0
  %v970 = vsel %vm235, %v966, 0.0
  %v971 = vsel %vm236, %v965, 0.0
  %v972 = vsel %vm237, %v968, 0.0
  %973 = vrot.lane.b32.xlu0 %v873, 112
  %v974 = vpop.permute.xlu0 %973
  %975 = vrot.lane.b32.xlu0 %v874, 112
  %v976 = vpop.permute.xlu0 %975
  %977 = vrot.lane.b32.xlu0 %v875, 112
  %v978 = vpop.permute.xlu0 %977
  %979 = vrot.lane.b32.xlu0 %v876, 112
  %v980 = vpop.permute.xlu0 %979
  %v981 = vsel %vm250, %v978, %v980
  %v982 = vsel %vm250, %v976, %v978
  %v983 = vsel %vm250, %v974, %v976
  %v984 = vsel %vm250, %v980, %v974
  %v985 = vsel %vm259, %v983, 0.0
  %v986 = vsel %vm260, %v982, 0.0
  %v987 = vsel %vm261, %v981, 0.0
  %v988 = vsel %vm262, %v984, 0.0
  %989 = vrot.lane.b32.xlu0 %v873, 111
  %v990 = vpop.permute.xlu0 %989
  %991 = vrot.lane.b32.xlu0 %v874, 111
  %v992 = vpop.permute.xlu0 %991
  %993 = vrot.lane.b32.xlu0 %v875, 111
  %v994 = vpop.permute.xlu0 %993
  %995 = vrot.lane.b32.xlu0 %v876, 111
  %v996 = vpop.permute.xlu0 %995
  %v997 = vsel %vm275, %v994, %v996
  %v998 = vsel %vm275, %v992, %v994
  %v999 = vsel %vm275, %v990, %v992
  %v1000 = vsel %vm275, %v996, %v990
  %v1001 = vsel %vm288, %v999, 0.0
  %v1002 = vsel %vm289, %v998, 0.0
  %v1003 = vsel %vm290, %v997, 0.0
  %v1004 = vsel %vm291, %v1000, 0.0
  %v1005 = vpack.c.bf16 %v905, %v889
  %v1006 = vpack.c.bf16 %v906, %v890
  %v1007 = vpack.c.bf16 %v907, %v891
  %v1008 = vpack.c.bf16 %v908, %v892
  %v1009 = vpack.c.bf16 %v937, %v921
  %v1010 = vpack.c.bf16 %v938, %v922
  %v1011 = vpack.c.bf16 %v939, %v923
  %v1012 = vpack.c.bf16 %v940, %v924
  %v1013 = vpack.c.bf16 %v953, %v873
  %v1014 = vpack.c.bf16 %v954, %v874
  %v1015 = vpack.c.bf16 %v955, %v875
  %v1016 = vpack.c.bf16 %v956, %v876
  %v1017 = vpack.c.bf16 %v985, %v969
  %v1018 = vpack.c.bf16 %v986, %v970
  %v1019 = vpack.c.bf16 %v987, %v971
  %v1020 = vpack.c.bf16 %v988, %v972
  %v1021 = vpack.c.bf16 %v1001, %v1001
  %v1022 = vpack.c.bf16 %v1002, %v1002
  %v1023 = vpack.c.bf16 %v1003, %v1003
  %v1024 = vpack.c.bf16 %v1004, %v1004
  %v1025 = vld [vmem:[%s7] sm:$0xf]
  %v1026 = vld [vmem:[%s7 + $0x4] sm:$0xf]
  %v1027 = vld [vmem:[%s8] sm:$0xff]
  %v1028 = vld [vmem:[%s8 + $0x8] sm:$0xff]
  %1030 = vset.pattern.permute.xlu0 0
  %1031 = vperm.xlu0 %1030, %v1027
  %v1032 = vpop.permute.xlu0 %1031
  %1035 = vset.pattern.permute.xlu0 0
  %1036 = vperm.xlu0 %1035, %v1028
  %v1037 = vpop.permute.xlu0 %1036
  %v1041 = vunpack.c.l.b16 %v1025
  %v1042 = vunpack.c.l.b16 %v1026
  %v1043 = vpack.c.b16 %v1042, %v1041
  %v1045 = vsel %vm654, %v1043, 0
  %v1048 = vsel %vm344, %v1021, 0
  %v1051 = vsel %vm344, %v1022, 0
  %v1054 = vsel %vm344, %v1023, 0
  %v1057 = vsel %vm344, %v1024, 0
  %1059 = vmatprep.subr.bf16.mxu0 %v1006
  %1060 = vmatpush1.bf16.msra.mxu0 %v1005
  %1061 = vmatprep.subr.bf16.mxu0 %v1010
  %1062 = vmatpush1.bf16.msra.mxu0 %v1009
  %1063 = vmatprep.subr.bf16.mxu0 %v1014
  %1064 = vmatpush1.bf16.msra.mxu0 %v1013
  %1065 = vmatprep.subr.bf16.mxu0 %v1018
  %1066 = vmatpush1.bf16.msra.mxu0 %v1017
  %1067 = vmatprep.subr.bf16.mxu0 %v1051
  %1068 = vmatpush1.bf16.msra.mxu0 %v1048
  %1069 = vmatprep.subr.bf16.mxu0 0
  %1070 = vmatpush1.bf16.msra.mxu0 0
  %1071 = vmatprep.subr.bf16.mxu0 0
  %1072 = vmatpush1.bf16.msra.mxu0 0
  %1073 = vmatprep.subr.bf16.mxu0 0
  %1074 = vmatpush1.bf16.msra.mxu0 0
  %1075 = vmatprep.subr.bf16.mxu0 0
  %1076 = vmatpush1.bf16.msra.mxu0 0
  %1077 = vmatprep.subr.bf16.mxu0 0
  %1078 = vmatpush1.bf16.msra.mxu0 0
  %1079 = vmatprep.subr.bf16.mxu0 0
  %1080 = vmatpush1.bf16.msra.mxu0 0
  %1081 = vmatprep.subr.bf16.mxu0 0
  %1082 = vmatpush1.bf16.msra.mxu0 0
  %1083 = vmatprep.subr.bf16.mxu0 0
  %1084 = vmatpush1.bf16.msra.mxu0 0
  %1085 = vmatprep.subr.bf16.mxu0 0
  %1086 = vmatpush1.bf16.msra.mxu0 0
  %1087 = vmatprep.subr.bf16.mxu0 0
  %1088 = vmatpush1.bf16.msra.mxu0 0
  %1089 = vmatprep.subr.bf16.mxu0 0
  %1090 = vmatpush1.bf16.msra.mxu0 0
  %1091 = vmatprep.mubr.bf16.mxu0 0
  %1092 = vmatmul.mubr.bf16.gmra.mrb[0].mxu0 %v1045
  %v1093 = vpop.f32.mrb[0].mxu0
  %v1094 = vadd.f32 %v1032, %v1093
  %v1095 = vpop.f32.mrb[0].mxu0
  %v1096 = vadd.f32 %v1032, %v1095
  %v1097 = vpop.f32.mrb[0].mxu0
  %v1098 = vadd.f32 %v1037, %v1097
  %v1099 = vpop.f32.mrb[0].mxu0
  %v1100 = vadd.f32 %v1037, %v1099
  %1101 = vdwg.mxu0
  %1102 = vmatprep.subr.bf16.mxu0 %v1008
  %1103 = vmatpush1.bf16.msra.mxu0 %v1007
  %1104 = vmatprep.subr.bf16.mxu0 %v1012
  %1105 = vmatpush1.bf16.msra.mxu0 %v1011
  %1106 = vmatprep.subr.bf16.mxu0 %v1016
  %1107 = vmatpush1.bf16.msra.mxu0 %v1015
  %1108 = vmatprep.subr.bf16.mxu0 %v1020
  %1109 = vmatpush1.bf16.msra.mxu0 %v1019
  %1110 = vmatprep.subr.bf16.mxu0 %v1057
  %1111 = vmatpush1.bf16.msra.mxu0 %v1054
  %1112 = vmatprep.subr.bf16.mxu0 0
  %1113 = vmatpush1.bf16.msra.mxu0 0
  %1114 = vmatprep.subr.bf16.mxu0 0
  %1115 = vmatpush1.bf16.msra.mxu0 0
  %1116 = vmatprep.subr.bf16.mxu0 0
  %1117 = vmatpush1.bf16.msra.mxu0 0
  %1118 = vmatprep.subr.bf16.mxu0 0
  %1119 = vmatpush1.bf16.msra.mxu0 0
  %1120 = vmatprep.subr.bf16.mxu0 0
  %1121 = vmatpush1.bf16.msra.mxu0 0
  %1122 = vmatprep.subr.bf16.mxu0 0
  %1123 = vmatpush1.bf16.msra.mxu0 0
  %1124 = vmatprep.subr.bf16.mxu0 0
  %1125 = vmatpush1.bf16.msra.mxu0 0
  %1126 = vmatprep.subr.bf16.mxu0 0
  %1127 = vmatpush1.bf16.msra.mxu0 0
  %1128 = vmatprep.subr.bf16.mxu0 0
  %1129 = vmatpush1.bf16.msra.mxu0 0
  %1130 = vmatprep.subr.bf16.mxu0 0
  %1131 = vmatpush1.bf16.msra.mxu0 0
  %1132 = vmatprep.subr.bf16.mxu0 0
  %1133 = vmatpush1.bf16.msra.mxu0 0
  %1134 = vmatprep.mubr.bf16.mxu0 0
  %1135 = vmatmul.mubr.bf16.gmra.mrb[0].mxu0 %v1045
  %v1136 = vpop.f32.mrb[0].mxu0
  %v1137 = vadd.f32 %v1032, %v1136
  %v1138 = vpop.f32.mrb[0].mxu0
  %v1139 = vadd.f32 %v1032, %v1138
  %v1140 = vpop.f32.mrb[0].mxu0
  %v1141 = vadd.f32 %v1037, %v1140
  %v1142 = vpop.f32.mrb[0].mxu0
  %v1143 = vadd.f32 %v1037, %v1142
  %1144 = vdwg.mxu0
  %v1145 = vmul.f32 %v1094, 0.1
  %v1146 = vmul.f32 %v1096, 0.1
  %v1147 = vmul.f32 %v1137, 0.1
  %v1148 = vmul.f32 %v1139, 0.1
  %v1149 = vmul.f32 %v1098, 0.1
  %v1150 = vmul.f32 %v1100, 0.1
  %v1151 = vmul.f32 %v1141, 0.1
  %v1152 = vmul.f32 %v1143, 0.1
  %v1153 = vmax.f32 %v1094, %v1145
  %v1154 = vmax.f32 %v1096, %v1146
  %v1155 = vmax.f32 %v1137, %v1147
  %v1156 = vmax.f32 %v1139, %v1148
  %v1157 = vmax.f32 %v1098, %v1149
  %v1158 = vmax.f32 %v1100, %v1150
  %v1159 = vmax.f32 %v1141, %v1151
  %v1160 = vmax.f32 %v1143, %v1152
  %v1161 = vadd.f32 %v1153, %v764
  %v1162 = vadd.f32 %v1154, %v765
  %v1163 = vadd.f32 %v1155, %v766
  %v1164 = vadd.f32 %v1156, %v767
  %v1165 = vadd.f32 %v1157, %v768
  %v1166 = vadd.f32 %v1158, %v769
  %v1167 = vadd.f32 %v1159, %v770
  %v1168 = vadd.f32 %v1160, %v771
  %v1169 = vld [vmem:[%s9] sm:$0xf]
  %v1170 = vld [vmem:[%s9 + $0x4] sm:$0xf]
  %v1171 = vld [vmem:[%s9 + $0x8] sm:$0xf]
  %v1172 = vpack.c.bf16 %v1165, %v1161
  %v1173 = vpack.c.bf16 %v1166, %v1162
  %v1174 = vpack.c.bf16 %v1167, %v1163
  %v1175 = vpack.c.bf16 %v1168, %v1164
  %v1176 = vld [vmem:[%s10] sm:$0xff]
  %v1177 = vld [vmem:[%s10 + $0x8] sm:$0xff]
  %v1178 = vld [vmem:[%s10 + $0x10] sm:$0xff]
  %1180 = vset.pattern.permute.xlu0 0
  %1181 = vperm.xlu0 %1180, %v1176
  %v1182 = vpop.permute.xlu0 %1181
  %1185 = vset.pattern.permute.xlu0 0
  %1186 = vperm.xlu0 %1185, %v1177
  %v1187 = vpop.permute.xlu0 %1186
  %1190 = vset.pattern.permute.xlu0 0
  %1191 = vperm.xlu0 %1190, %v1178
  %v1192 = vpop.permute.xlu0 %1191
  %v1197 = vunpack.c.l.b16 %v1169
  %v1198 = vunpack.c.l.b16 %v1170
  %v1199 = vunpack.c.l.b16 %v1171
  %v1200 = vpack.c.b16 %v1198, %v1197
  %v1201 = vpack.c.b16 %v1199, %v1199
  %v1203 = vsel %vm783, %v1200, 0
  %v1206 = vsel %vm783, %v1201, 0
  %1208 = vmatprep.subr.bf16.mxu0 %v1173
  %1209 = vmatpush1.bf16.msra.mxu0 %v1172
  %1210 = vmatprep.subr.bf16.mxu0 0
  %1211 = vmatpush1.bf16.msra.mxu0 0
  %1212 = vmatprep.subr.bf16.mxu0 0
  %1213 = vmatpush1.bf16.msra.mxu0 0
  %1214 = vmatprep.subr.bf16.mxu0 0
  %1215 = vmatpush1.bf16.msra.mxu0 0
  %1216 = vmatprep.subr.bf16.mxu0 0
  %1217 = vmatpush1.bf16.msra.mxu0 0
  %1218 = vmatprep.subr.bf16.mxu0 0
  %1219 = vmatpush1.bf16.msra.mxu0 0
  %1220 = vmatprep.subr.bf16.mxu0 0
  %1221 = vmatpush1.bf16.msra.mxu0 0
  %1222 = vmatprep.subr.bf16.mxu0 0
  %1223 = vmatpush1.bf16.msra.mxu0 0
  %1224 = vmatprep.subr.bf16.mxu0 0
  %1225 = vmatpush1.bf16.msra.mxu0 0
  %1226 = vmatprep.subr.bf16.mxu0 0
  %1227 = vmatpush1.bf16.msra.mxu0 0
  %1228 = vmatprep.subr.bf16.mxu0 0
  %1229 = vmatpush1.bf16.msra.mxu0 0
  %1230 = vmatprep.subr.bf16.mxu0 0
  %1231 = vmatpush1.bf16.msra.mxu0 0
  %1232 = vmatprep.subr.bf16.mxu0 0
  %1233 = vmatpush1.bf16.msra.mxu0 0
  %1234 = vmatprep.subr.bf16.mxu0 0
  %1235 = vmatpush1.bf16.msra.mxu0 0
  %1236 = vmatprep.subr.bf16.mxu0 0
  %1237 = vmatpush1.bf16.msra.mxu0 0
  %1238 = vmatprep.subr.bf16.mxu0 0
  %1239 = vmatpush1.bf16.msra.mxu0 0
  %1240 = vmatprep.mubr.bf16.mxu0 0
  %1241 = vmatmul.mubr.bf16.gmra.mrb[0].mxu0 %v1203
  %v1242 = vpop.f32.mrb[0].mxu0
  %v1243 = vadd.f32 %v1182, %v1242
  %v1244 = vpop.f32.mrb[0].mxu0
  %v1245 = vadd.f32 %v1182, %v1244
  %v1246 = vpop.f32.mrb[0].mxu0
  %v1247 = vadd.f32 %v1187, %v1246
  %v1248 = vpop.f32.mrb[0].mxu0
  %v1249 = vadd.f32 %v1187, %v1248
  %1250 = vmatprep.mubr.bf16.mxu0 0
  %1251 = vmatmul.mubr.bf16.gmra.mrb[0].mxu0 %v1206
  %v1252 = vpop.f32.mrb[0].mxu0
  %v1253 = vadd.f32 %v1192, %v1252
  %v1254 = vpop.f32.mrb[0].mxu0
  %v1255 = vadd.f32 %v1192, %v1254
  %v1256 = vpop.f32.mrb[0].mxu0
  %v1257 = vpop.f32.mrb[0].mxu0
  %1258 = vdwg.mxu0
  %1259 = vmatprep.subr.bf16.mxu0 %v1175
  %1260 = vmatpush1.bf16.msra.mxu0 %v1174
  %1261 = vmatprep.subr.bf16.mxu0 0
  %1262 = vmatpush1.bf16.msra.mxu0 0
  %1263 = vmatprep.subr.bf16.mxu0 0
  %1264 = vmatpush1.bf16.msra.mxu0 0
  %1265 = vmatprep.subr.bf16.mxu0 0
  %1266 = vmatpush1.bf16.msra.mxu0 0
  %1267 = vmatprep.subr.bf16.mxu0 0
  %1268 = vmatpush1.bf16.msra.mxu0 0
  %1269 = vmatprep.subr.bf16.mxu0 0
  %1270 = vmatpush1.bf16.msra.mxu0 0
  %1271 = vmatprep.subr.bf16.mxu0 0
  %1272 = vmatpush1.bf16.msra.mxu0 0
  %1273 = vmatprep.subr.bf16.mxu0 0
  %1274 = vmatpush1.bf16.msra.mxu0 0
  %1275 = vmatprep.subr.bf16.mxu0 0
  %1276 = vmatpush1.bf16.msra.mxu0 0
  %1277 = vmatprep.subr.bf16.mxu0 0
  %1278 = vmatpush1.bf16.msra.mxu0 0
  %1279 = vmatprep.subr.bf16.mxu0 0
  %1280 = vmatpush1.bf16.msra.mxu0 0
  %1281 = vmatprep.subr.bf16.mxu0 0
  %1282 = vmatpush1.bf16.msra.mxu0 0
  %1283 = vmatprep.subr.bf16.mxu0 0
  %1284 = vmatpush1.bf16.msra.mxu0 0
  %1285 = vmatprep.subr.bf16.mxu0 0
  %1286 = vmatpush1.bf16.msra.mxu0 0
  %1287 = vmatprep.subr.bf16.mxu0 0
  %1288 = vmatpush1.bf16.msra.mxu0 0
  %1289 = vmatprep.subr.bf16.mxu0 0
  %1290 = vmatpush1.bf16.msra.mxu0 0
  %1291 = vmatprep.mubr.bf16.mxu0 0
  %1292 = vmatmul.mubr.bf16.gmra.mrb[0].mxu0 %v1203
  %v1293 = vpop.f32.mrb[0].mxu0
  %v1294 = vadd.f32 %v1182, %v1293
  %v1295 = vpop.f32.mrb[0].mxu0
  %v1296 = vadd.f32 %v1182, %v1295
  %v1297 = vpop.f32.mrb[0].mxu0
  %v1298 = vadd.f32 %v1187, %v1297
  %v1299 = vpop.f32.mrb[0].mxu0
  %v1300 = vadd.f32 %v1187, %v1299
  %1301 = vmatprep.mubr.bf16.mxu0 0
  %1302 = vmatmul.mubr.bf16.gmra.mrb[0].mxu0 %v1206
  %v1303 = vpop.f32.mrb[0].mxu0
  %v1304 = vadd.f32 %v1192, %v1303
  %v1305 = vpop.f32.mrb[0].mxu0
  %v1306 = vadd.f32 %v1192, %v1305
  %v1307 = vpop.f32.mrb[0].mxu0
  %v1308 = vpop.f32.mrb[0].mxu0
  %1309 = vdwg.mxu0
  %v1310 = vlaneseq
  %v1311 = vshrl.u32 %v1310, 7
  %v1312 = vadd.s32 %v1311, 8
  %v1313 = vadd.s32 %v1311, 16
  %vm1314 = vcmp.eq.s32.totalorder %v1311, 0
  %vm1315 = vcmp.eq.s32.totalorder %v1312, 0
  %vm1316 = vcmp.eq.s32.totalorder %v1313, 0
  %vm1317 = vcmp.eq.s32.totalorder %v1311, 1
  %vm1318 = vcmp.eq.s32.totalorder %v1312, 1
  %vm1319 = vcmp.eq.s32.totalorder %v1313, 1
  %vm1320 = vcmp.eq.s32.totalorder %v1311, 2
  %vm1321 = vcmp.eq.s32.totalorder %v1312, 2
  %vm1322 = vcmp.eq.s32.totalorder %v1313, 2
  %vm1323 = vcmp.eq.s32.totalorder %v1311, 3
  %vm1324 = vcmp.eq.s32.totalorder %v1312, 3
  %vm1325 = vcmp.eq.s32.totalorder %v1313, 3
  %v1326 = vsel %vm1320, 14.0, 0.0
  %v1327 = vsel %vm1321, 14.0, 0.0
  %v1328 = vsel %vm1322, 14.0, 0.0
  %v1329 = vsel %vm1323, 10.0, %v1326
  %v1330 = vsel %vm1324, 10.0, %v1327
  %v1331 = vsel %vm1325, 10.0, %v1328
  %vm1332 = vcmp.eq.s32.totalorder %v1311, 8
  %vm1333 = vcmp.eq.s32.totalorder %v1312, 8
  %vm1334 = vcmp.eq.s32.totalorder %v1313, 8
  %vm1335 = vcmp.eq.s32.totalorder %v1311, 9
  %vm1336 = vcmp.eq.s32.totalorder %v1312, 9
  %vm1337 = vcmp.eq.s32.totalorder %v1313, 9
  %vm1338 = vcmp.eq.s32.totalorder %v1311, 10
  %vm1339 = vcmp.eq.s32.totalorder %v1312, 10
  %vm1340 = vcmp.eq.s32.totalorder %v1313, 10
  %vm1341 = vcmp.eq.s32.totalorder %v1311, 11
  %vm1342 = vcmp.eq.s32.totalorder %v1312, 11
  %vm1343 = vcmp.eq.s32.totalorder %v1313, 11
  %vm1344 = vmor %vm1314, %vm1332
  %vm1345 = vmor %vm1315, %vm1333
  %vm1346 = vmor %vm1316, %vm1334
  %vm1347 = vmor %vm1317, %vm1335
  %vm1348 = vmor %vm1318, %vm1336
  %vm1349 = vmor %vm1319, %vm1337
  %vm1350 = vmor %vm1320, %vm1338
  %vm1351 = vmor %vm1321, %vm1339
  %vm1352 = vmor %vm1322, %vm1340
  %vm1353 = vmor %vm1323, %vm1341
  %vm1354 = vmor %vm1324, %vm1342
  %vm1355 = vmor %vm1325, %vm1343
  %v1356 = vsel %vm1338, 27.0, %v1329
  %v1357 = vsel %vm1339, 27.0, %v1330
  %v1358 = vsel %vm1340, 27.0, %v1331
  %v1359 = vsel %vm1341, 23.0, %v1356
  %v1360 = vsel %vm1342, 23.0, %v1357
  %v1361 = vsel %vm1343, 23.0, %v1358
  %vm1362 = vcmp.eq.s32.totalorder %v1311, 16
  %vm1363 = vcmp.eq.s32.totalorder %v1312, 16
  %vm1364 = vcmp.eq.s32.totalorder %v1313, 16
  %vm1365 = vcmp.eq.s32.totalorder %v1311, 17
  %vm1366 = vcmp.eq.s32.totalorder %v1312, 17
  %vm1367 = vcmp.eq.s32.totalorder %v1313, 17
  %vm1368 = vcmp.eq.s32.totalorder %v1311, 18
  %vm1369 = vcmp.eq.s32.totalorder %v1312, 18
  %vm1370 = vcmp.eq.s32.totalorder %v1313, 18
  %vm1371 = vcmp.eq.s32.totalorder %v1311, 19
  %vm1372 = vcmp.eq.s32.totalorder %v1312, 19
  %vm1373 = vcmp.eq.s32.totalorder %v1313, 19
  %vm1374 = vmor %vm1344, %vm1362
  %vm1375 = vmor %vm1345, %vm1363
  %vm1376 = vmor %vm1346, %vm1364
  %vm1377 = vmor %vm1347, %vm1365
  %vm1378 = vmor %vm1348, %vm1366
  %vm1379 = vmor %vm1349, %vm1367
  %vm1380 = vmor %vm1350, %vm1368
  %vm1381 = vmor %vm1351, %vm1369
  %vm1382 = vmor %vm1352, %vm1370
  %vm1383 = vmor %vm1353, %vm1371
  %vm1384 = vmor %vm1354, %vm1372
  %vm1385 = vmor %vm1355, %vm1373
  %v1386 = vsel %vm1368, 58.0, %v1359
  %v1387 = vsel %vm1369, 58.0, %v1360
  %v1388 = vsel %vm1370, 58.0, %v1361
  %v1389 = vsel %vm1371, 37.0, %v1386
  %v1390 = vsel %vm1372, 37.0, %v1387
  %v1391 = vsel %vm1373, 37.0, %v1388
  %vm1392 = vmor %vm1374, %vm1377
  %vm1393 = vmor %vm1375, %vm1378
  %vm1394 = vmor %vm1376, %vm1379
  %vm1395 = vmor %vm1380, %vm1383
  %vm1396 = vmor %vm1381, %vm1384
  %vm1397 = vmor %vm1382, %vm1385
  %v1398 = vsub.f32 0.0, %v1243
  %v1399 = vsub.f32 0.0, %v1245
  %v1400 = vsub.f32 0.0, %v1294
  %v1401 = vsub.f32 0.0, %v1296
  %v1402 = vsub.f32 0.0, %v1247
  %v1403 = vsub.f32 0.0, %v1249
  %v1404 = vsub.f32 0.0, %v1298
  %v1405 = vsub.f32 0.0, %v1300
  %v1406 = vsub.f32 0.0, %v1253
  %v1407 = vsub.f32 0.0, %v1255
  %v1408 = vsub.f32 0.0, %v1304
  %v1409 = vsub.f32 0.0, %v1306
  %v1410 = vmul.f32 %v1398, 1.442695
  %v1411 = vpow.pop %v1410
  %v1412 = vmul.f32 %v1399, 1.442695
  %v1413 = vpow.pop %v1412
  %v1414 = vmul.f32 %v1400, 1.442695
  %v1415 = vpow.pop %v1414
  %v1416 = vmul.f32 %v1401, 1.442695
  %v1417 = vpow.pop %v1416
  %v1418 = vmul.f32 %v1402, 1.442695
  %v1419 = vpow.pop %v1418
  %v1420 = vmul.f32 %v1403, 1.442695
  %v1421 = vpow.pop %v1420
  %v1422 = vmul.f32 %v1404, 1.442695
  %v1423 = vpow.pop %v1422
  %v1424 = vmul.f32 %v1405, 1.442695
  %v1425 = vpow.pop %v1424
  %v1426 = vmul.f32 %v1406, 1.442695
  %v1427 = vpow.pop %v1426
  %v1428 = vmul.f32 %v1407, 1.442695
  %v1429 = vpow.pop %v1428
  %v1430 = vmul.f32 %v1408, 1.442695
  %v1431 = vpow.pop %v1430
  %v1432 = vmul.f32 %v1409, 1.442695
  %v1433 = vpow.pop %v1432
  %v1434 = vadd.f32 %v1411, 1.0
  %v1435 = vadd.f32 %v1413, 1.0
  %v1436 = vadd.f32 %v1415, 1.0
  %v1437 = vadd.f32 %v1417, 1.0
  %v1438 = vadd.f32 %v1419, 1.0
  %v1439 = vadd.f32 %v1421, 1.0
  %v1440 = vadd.f32 %v1423, 1.0
  %v1441 = vadd.f32 %v1425, 1.0
  %v1442 = vadd.f32 %v1427, 1.0
  %v1443 = vadd.f32 %v1429, 1.0
  %v1444 = vadd.f32 %v1431, 1.0
  %v1445 = vadd.f32 %v1433, 1.0
  %v1446 = vrcp.pop %v1434
  %v1447 = vmul.f32 1.0, %v1446
  %v1448 = vrcp.pop %v1435
  %v1449 = vmul.f32 1.0, %v1448
  %v1450 = vrcp.pop %v1436
  %v1451 = vmul.f32 1.0, %v1450
  %v1452 = vrcp.pop %v1437
  %v1453 = vmul.f32 1.0, %v1452
  %v1454 = vrcp.pop %v1438
  %v1455 = vmul.f32 1.0, %v1454
  %v1456 = vrcp.pop %v1439
  %v1457 = vmul.f32 1.0, %v1456
  %v1458 = vrcp.pop %v1440
  %v1459 = vmul.f32 1.0, %v1458
  %v1460 = vrcp.pop %v1441
  %v1461 = vmul.f32 1.0, %v1460
  %v1462 = vrcp.pop %v1442
  %v1463 = vmul.f32 1.0, %v1462
  %v1464 = vrcp.pop %v1443
  %v1465 = vmul.f32 1.0, %v1464
  %v1466 = vrcp.pop %v1444
  %v1467 = vmul.f32 1.0, %v1466
  %v1468 = vrcp.pop %v1445
  %v1469 = vmul.f32 1.0, %v1468
  %v1470 = vmul.f32 %v1243, 1.442695
  %v1471 = vpow.pop %v1470
  %v1472 = vmul.f32 %v1245, 1.442695
  %v1473 = vpow.pop %v1472
  %v1474 = vmul.f32 %v1294, 1.442695
  %v1475 = vpow.pop %v1474
  %v1476 = vmul.f32 %v1296, 1.442695
  %v1477 = vpow.pop %v1476
  %v1478 = vmul.f32 %v1247, 1.442695
  %v1479 = vpow.pop %v1478
  %v1480 = vmul.f32 %v1249, 1.442695
  %v1481 = vpow.pop %v1480
  %v1482 = vmul.f32 %v1298, 1.442695
  %v1483 = vpow.pop %v1482
  %v1484 = vmul.f32 %v1300, 1.442695
  %v1485 = vpow.pop %v1484
  %v1486 = vmul.f32 %v1253, 1.442695
  %v1487 = vpow.pop %v1486
  %v1488 = vmul.f32 %v1255, 1.442695
  %v1489 = vpow.pop %v1488
  %v1490 = vmul.f32 %v1304, 1.442695
  %v1491 = vpow.pop %v1490
  %v1492 = vmul.f32 %v1306, 1.442695
  %v1493 = vpow.pop %v1492
  %v1494 = vmul.f32 %v1471, %v1389
  %v1495 = vmul.f32 %v1473, %v1389
  %v1496 = vmul.f32 %v1475, %v1389
  %v1497 = vmul.f32 %v1477, %v1389
  %v1498 = vmul.f32 %v1479, %v1390
  %v1499 = vmul.f32 %v1481, %v1390
  %v1500 = vmul.f32 %v1483, %v1390
  %v1501 = vmul.f32 %v1485, %v1390
  %v1502 = vmul.f32 %v1487, %v1391
  %v1503 = vmul.f32 %v1489, %v1391
  %v1504 = vmul.f32 %v1491, %v1391
  %v1505 = vmul.f32 %v1493, %v1391
  %vm1518 = vcmask 1045504
  %v1519 = vrot.slane %v1494, 2
  %v1520 = vrot.slane %v1498, 2
  %v1521 = vsel %vm1518, %v1519, %v1520
  %v1522 = vrot.slane %v1495, 2
  %v1523 = vrot.slane %v1499, 2
  %v1524 = vsel %vm1518, %v1522, %v1523
  %v1525 = vrot.slane %v1496, 2
  %v1526 = vrot.slane %v1500, 2
  %v1527 = vsel %vm1518, %v1525, %v1526
  %v1528 = vrot.slane %v1497, 2
  %v1529 = vrot.slane %v1501, 2
  %v1530 = vsel %vm1518, %v1528, %v1529
  %v1531 = vrot.slane %v1502, 2
  %v1532 = vsel %vm1518, %v1520, %v1531
  %v1533 = vrot.slane %v1503, 2
  %v1534 = vsel %vm1518, %v1523, %v1533
  %v1535 = vrot.slane %v1504, 2
  %v1536 = vsel %vm1518, %v1526, %v1535
  %v1537 = vrot.slane %v1505, 2
  %v1538 = vsel %vm1518, %v1529, %v1537
  %v1555 = vsel %vm1518, %v1531, %v1519
  %v1556 = vsel %vm1518, %v1533, %v1522
  %v1557 = vsel %vm1518, %v1535, %v1525
  %v1558 = vsel %vm1518, %v1537, %v1528
  %v1559 = vcvt.s32.f32 %v48
  %v1560 = vcvt.s32.f32 %v49
  %v1561 = vcvt.s32.f32 %v50
  %v1562 = vcvt.s32.f32 %v51
  %v1563 = vcvt.s32.f32 %v52
  %v1564 = vcvt.s32.f32 %v53
  %v1565 = vcvt.s32.f32 %v54
  %v1566 = vcvt.s32.f32 %v55
  %v1567 = vsel %vm1377, 1, 0
  %v1568 = vsel %vm1378, 1, 0
  %v1569 = vsel %vm1379, 1, 0
  %vm1570 = vcmp.eq.s32.totalorder %v1567, 1
  %vm1571 = vcmp.eq.s32.totalorder %v1568, 1
  %vm1572 = vcmp.eq.s32.totalorder %v1569, 1
  %v1573 = vsel %vm1570, %v1563, 0.0
  %v1574 = vsel %vm1570, %v1564, 0.0
  %v1575 = vsel %vm1570, %v1565, 0.0
  %v1576 = vsel %vm1570, %v1566, 0.0
  %v1577 = vsel %vm1571, %v1563, 0.0
  %v1578 = vsel %vm1571, %v1564, 0.0
  %v1579 = vsel %vm1571, %v1565, 0.0
  %v1580 = vsel %vm1571, %v1566, 0.0
  %v1581 = vsel %vm1572, %v1563, 0.0
  %v1582 = vsel %vm1572, %v1564, 0.0
  %v1583 = vsel %vm1572, %v1565, 0.0
  %v1584 = vsel %vm1572, %v1566, 0.0
  %v1585 = vsel %vm1374, 1, 0
  %v1586 = vsel %vm1375, 1, 0
  %v1587 = vsel %vm1376, 1, 0
  %vm1588 = vcmp.eq.s32.totalorder %v1585, 1
  %vm1589 = vcmp.eq.s32.totalorder %v1586, 1
  %vm1590 = vcmp.eq.s32.totalorder %v1587, 1
  %v1591 = vsel %vm1588, %v1559, %v1573
  %v1592 = vsel %vm1588, %v1560, %v1574
  %v1593 = vsel %vm1588, %v1561, %v1575
  %v1594 = vsel %vm1588, %v1562, %v1576
  %v1595 = vsel %vm1589, %v1559, %v1577
  %v1596 = vsel %vm1589, %v1560, %v1578
  %v1597 = vsel %vm1589, %v1561, %v1579
  %v1598 = vsel %vm1589, %v1562, %v1580
  %v1599 = vsel %vm1590, %v1559, %v1581
  %v1600 = vsel %vm1590, %v1560, %v1582
  %v1601 = vsel %vm1590, %v1561, %v1583
  %v1602 = vsel %vm1590, %v1562, %v1584
  %v1603 = vadd.f32 %v1447, %v1591
  %v1604 = vadd.f32 %v1449, %v1592
  %v1605 = vadd.f32 %v1451, %v1593
  %v1606 = vadd.f32 %v1453, %v1594
  %v1607 = vadd.f32 %v1455, %v1595
  %v1608 = vadd.f32 %v1457, %v1596
  %v1609 = vadd.f32 %v1459, %v1597
  %v1610 = vadd.f32 %v1461, %v1598
  %v1611 = vadd.f32 %v1463, %v1599
  %v1612 = vadd.f32 %v1465, %v1600
  %v1613 = vadd.f32 %v1467, %v1601
  %v1614 = vadd.f32 %v1469, %v1602
  %v1615 = vmul.f32 %v1521, 0.5
  %v1616 = vmul.f32 %v1524, 0.5
  %v1617 = vmul.f32 %v1527, 0.5
  %v1618 = vmul.f32 %v1530, 0.5
  %v1619 = vmul.f32 %v1532, 0.5
  %v1620 = vmul.f32 %v1534, 0.5
  %v1621 = vmul.f32 %v1536, 0.5
  %v1622 = vmul.f32 %v1538, 0.5
  %v1623 = vmul.f32 %v1555, 0.5
  %v1624 = vmul.f32 %v1556, 0.5
  %v1625 = vmul.f32 %v1557, 0.5
  %v1626 = vmul.f32 %v1558, 0.5
  %v1627 = vsub.f32 %v1603, %v1615
  %v1628 = vsub.f32 %v1604, %v1616
  %v1629 = vsub.f32 %v1605, %v1617
  %v1630 = vsub.f32 %v1606, %v1618
  %v1631 = vsub.f32 %v1607, %v1619
  %v1632 = vsub.f32 %v1608, %v1620
  %v1633 = vsub.f32 %v1609, %v1621
  %v1634 = vsub.f32 %v1610, %v1622
  %v1635 = vsub.f32 %v1611, %v1623
  %v1636 = vsub.f32 %v1612, %v1624
  %v1637 = vsub.f32 %v1613, %v1625
  %v1638 = vsub.f32 %v1614, %v1626
  %v1639 = vsel %vm1395, 1, 0
  %v1640 = vsel %vm1396, 1, 0
  %v1641 = vsel %vm1397, 1, 0
  %vm1642 = vcmp.eq.s32.totalorder %v1639, 1
  %vm1643 = vcmp.eq.s32.totalorder %v1640, 1
  %vm1644 = vcmp.eq.s32.totalorder %v1641, 1
  %v1645 = vsel %vm1642, %v1494, %v1447
  %v1646 = vsel %vm1642, %v1495, %v1449
  %v1647 = vsel %vm1642, %v1496, %v1451
  %v1648 = vsel %vm1642, %v1497, %v1453
  %v1649 = vsel %vm1643, %v1498, %v1455
  %v1650 = vsel %vm1643, %v1499, %v1457
  %v1651 = vsel %vm1643, %v1500, %v1459
  %v1652 = vsel %vm1643, %v1501, %v1461
  %v1653 = vsel %vm1644, %v1502, %v1463
  %v1654 = vsel %vm1644, %v1503, %v1465
  %v1655 = vsel %vm1644, %v1504, %v1467
  %v1656 = vsel %vm1644, %v1505, %v1469
  %v1657 = vsel %vm1392, 1, 0
  %v1658 = vsel %vm1393, 1, 0
  %v1659 = vsel %vm1394, 1, 0
  %vm1660 = vcmp.eq.s32.totalorder %v1657, 1
  %vm1661 = vcmp.eq.s32.totalorder %v1658, 1
  %vm1662 = vcmp.eq.s32.totalorder %v1659, 1
  %v1663 = vsel %vm1660, %v1627, %v1645
  %v1664 = vsel %vm1660, %v1628, %v1646
  %v1665 = vsel %vm1660, %v1629, %v1647
  %v1666 = vsel %vm1660, %v1630, %v1648
  %v1667 = vsel %vm1661, %v1631, %v1649
  %v1668 = vsel %vm1661, %v1632, %v1650
  %v1669 = vsel %vm1661, %v1633, %v1651
  %v1670 = vsel %vm1661, %v1634, %v1652
  %v1671 = vsel %vm1662, %v1635, %v1653
  %v1672 = vsel %vm1662, %v1636, %v1654
  %v1673 = vsel %vm1662, %v1637, %v1655
  %v1674 = vsel %vm1662, %v1638, %v1656
  %1675 = vst [vmem:[%s11] sm:$0xff] %v1663
  %1676 = vst [vmem:[%s11 + $0x8] sm:$0xff] %v1664
  %1677 = vst [vmem:[%s11 + $0x10] sm:$0xff] %v1665
  %1678 = vst [vmem:[%s11 + $0x18] sm:$0xff] %v1666
  %1679 = vst [vmem:[%s11 + $0x20] sm:$0xff] %v1667
  %1680 = vst [vmem:[%s11 + $0x28] sm:$0xff] %v1668
  %1681 = vst [vmem:[%s11 + $0x30] sm:$0xff] %v1669
  %1682 = vst [vmem:[%s11 + $0x38] sm:$0xff] %v1670
  %1683 = vst [vmem:[%s11 + $0x40] sm:$0xff] %v1671
  %1684 = vst [vmem:[%s11 + $0x48] sm:$0xff] %v1672
  %1685 = vst [vmem:[%s11 + $0x50] sm:$0xff] %v1673
  %1686 = vst [vmem:[%s11 + $0x58] sm:$0xff] %v1674
  // Predicated region
  $region46: #{_lambda_.1} parent=0 // pred_check
    _
  $region47: #{_lambda_.1} parent=0 // pred_check_branch
    %1688 = sbr.rel (0) target = $region49
  $region48: #{_lambda_.1} parent=0 // pred_region
    _
  $region49: #{_lambda_.1} parent=0 // pred_fallthru
    _
  // Predicated region
  $region50: #{_lambda_.1} parent=0 // pred_check
    _
  $region51: #{_lambda_.1} parent=0 // pred_check_branch
    %1690 = sbr.rel (0) target = $region53
  $region52: #{_lambda_.1} parent=0 // pred_region
    _
  $region53: #{_lambda_.1} parent=0 // pred_fallthru
    _

</llo_original>
